<compile_context>
chip_gen: v7x
topology: tpu7x:2x2x1
jax: 0.10.0
libtpu: 0.0.40
codegen_flags: <defaults>
</compile_context>

<pallas_src>
import jax
import jax.numpy as jnp
from jax.experimental import pallas as pl
from jax.experimental.pallas import tpu as pltpu


# -----------------------------------------------------------------------------
# Fused LeNet forward kernel: one grid step == one batch tile of TB images.
# -----------------------------------------------------------------------------
def lenet_kernel(x_ref, t1_ref, b1_ref, sw1_ref, t2_ref, b2_ref, sw2_ref,
                 wf1_ref, bf1_ref, wf2_ref, bf2_ref, wf3_ref, bf3_ref, o_ref):
    f32, bf16 = jnp.float32, jnp.bfloat16
    TB = x_ref.shape[0]

    # ---- conv1 + bias + ReLU -------------------------------------------------
    # LHS rows = (image, quad-row pr), K = two 112-lane quad-rows (pr, pr+1);
    # output lane n = parity*288 + u*144 + wo*6 + oc, conv row ho = 4*pr+2*u+parity.
    l1a = x_ref[:, 0:6, :].astype(bf16).reshape(TB * 6, 112)
    l1b = x_ref[:, 1:7, :].astype(bf16).reshape(TB * 6, 112)
    c1 = jnp.dot(l1a, t1_ref[0], preferred_element_type=f32)
    c1 = c1 + jnp.dot(l1b, t1_ref[1], preferred_element_type=f32)     # (TB*6, 576)
    c1 = jnp.maximum(c1 + b1_ref[...], 0.0)

    # ---- maxpool 2x2 #1: rows = lane-half max (VPU), cols = 0/1 selection matmul
    hm1 = jnp.maximum(c1[:, 0:288], c1[:, 288:576]).astype(bf16)      # (TB*6, 288)
    pc1 = jnp.dot(hm1, sw1_ref[...], preferred_element_type=f32)
    p1 = jnp.maximum(pc1[:, 0:144], pc1[:, 144:288])                  # (TB*6, 144)
    p1 = p1.astype(bf16).reshape(TB, 6, 144)

    # ---- conv2 + bias + ReLU: 3 K-chunks over overlapping pool1 row-pair windows
    c2 = jnp.dot(p1[:, 0:4, :].reshape(TB * 4, 144), t2_ref[0],
                 preferred_element_type=f32)
    c2 = c2 + jnp.dot(p1[:, 1:5, :].reshape(TB * 4, 144), t2_ref[1],
                      preferred_element_type=f32)
    c2 = c2 + jnp.dot(p1[:, 2:6, :].reshape(TB * 4, 144), t2_ref[2],
                      preferred_element_type=f32)                     # (TB*4, 256)
    c2 = jnp.maximum(c2 + b2_ref[...], 0.0)

    # ---- maxpool 2x2 #2 --------------------------------------------------------
    hm2 = jnp.maximum(c2[:, 0:128], c2[:, 128:256]).astype(bf16)      # (TB*4, 128)
    pc2 = jnp.dot(hm2, sw2_ref[...], preferred_element_type=f32)
    p2 = jnp.maximum(pc2[:, 0:64], pc2[:, 64:128])                    # (TB*4, 64)
    p2 = p2.astype(bf16).reshape(TB, 4, 64)

    # ---- fc1 (+ReLU): torch NCHW flatten folded into per-row weight blocks ----
    f1 = jnp.dot(p2[:, 0, :], wf1_ref[0], preferred_element_type=f32)
    for h in range(1, 4):
        f1 = f1 + jnp.dot(p2[:, h, :], wf1_ref[h], preferred_element_type=f32)
    f1 = jnp.maximum(f1 + bf1_ref[...], 0.0)                          # (TB, 120)

    # ---- fc2 (+ReLU), fc3 (lane-padded to 128 output columns) ----------------
    f2 = jnp.maximum(jnp.dot(f1.astype(bf16), wf2_ref[...],
                             preferred_element_type=f32) + bf2_ref[...], 0.0)
    o_ref[0] = (jnp.dot(f2.astype(bf16), wf3_ref[...],
                        preferred_element_type=f32) + bf3_ref[...])   # (TB, 128)


# -----------------------------------------------------------------------------
# One-time weight packing (outside the jitted forward, outside the kernel).
# -----------------------------------------------------------------------------
def pack_params(p):
    f32, bf16 = jnp.float32, jnp.bfloat16
    ar = jnp.arange

    w1, b1 = p["w1"].astype(f32), p["b1"].astype(f32)       # (6,1,5,5), (6,)
    w2, b2 = p["w2"].astype(f32), p["b2"].astype(f32)       # (16,6,5,5), (16,)
    wf1, bf1 = p["wf1"].astype(f32), p["bf1"].astype(f32)   # (120,256), (120,)
    wf2, bf2 = p["wf2"].astype(f32), p["bf2"].astype(f32)   # (84,120), (84,)
    wf3, bf3 = p["wf3"].astype(f32), p["bf3"].astype(f32)   # (10,84), (10,)

    # conv1 banded weights, split into two 112-row K-chunks.
    # K = j*112 + rr*28 + w  (image row = 4*pr + 4*j + rr), N = pa*288+u*144+wo*6+oc
    # (conv output row ho = 4*pr + 2*u + pa);  entry = w1[oc, 0, i, dw] with
    # i = 4*j + rr - (2*u + pa), dw = w - wo, zero outside 0..4.
    w1s = w1[:, 0, :, :]                                     # (6,5,5)
    j_ = ar(2).reshape(2, 1, 1, 1, 1, 1, 1)
    r_ = ar(4).reshape(1, 4, 1, 1, 1, 1, 1)
    w_ = ar(28).reshape(1, 1, 28, 1, 1, 1, 1)
    pa = ar(2).reshape(1, 1, 1, 2, 1, 1, 1)
    u_ = ar(2).reshape(1, 1, 1, 1, 2, 1, 1)
    wo = ar(24).reshape(1, 1, 1, 1, 1, 24, 1)
    oc = ar(6).reshape(1, 1, 1, 1, 1, 1, 6)
    i_ = 4 * j_ + r_ - (2 * u_ + pa)
    dw = w_ - wo
    t1 = jnp.where((i_ >= 0) & (i_ <= 4) & (dw >= 0) & (dw <= 4),
                   w1s[oc, jnp.clip(i_, 0, 4), jnp.clip(dw, 0, 4)], 0.0)
    t1 = t1.reshape(2, 112, 576).astype(bf16)
    b1t = jnp.tile(b1, 96).reshape(1, 576)                   # lane n -> b1[n % 6]

    # pool1 column selection (0/1, exact in bf16): out lane hf*144+u2*72+wp*6+cc
    # picks in lane u*144 + (2*wp+hf)*6 + cc.
    u_ = ar(2).reshape(2, 1, 1, 1, 1, 1, 1)
    wo = ar(24).reshape(1, 24, 1, 1, 1, 1, 1)
    oc = ar(6).reshape(1, 1, 6, 1, 1, 1, 1)
    hf = ar(2).reshape(1, 1, 1, 2, 1, 1, 1)
    u2 = ar(2).reshape(1, 1, 1, 1, 2, 1, 1)
    wp = ar(12).reshape(1, 1, 1, 1, 1, 12, 1)
    cc = ar(6).reshape(1, 1, 1, 1, 1, 1, 6)
    sw1 = ((u_ == u2) & (oc == cc) & (wo == 2 * wp + hf)).astype(bf16)
    sw1 = sw1.reshape(288, 288)

    # conv2 banded weights, three 144-row K-chunks.
    # K = j*144 + u*72 + wp*6 + c  (pool1 row = 2*(q+j) + u),
    # N = pa*128 + wo2*16 + oc2    (conv2 output row = 2*q + pa);
    # entry = w2[oc2, c, i, dw] with i = 2*j + u - pa, dw = wp - wo2.
    j_ = ar(3).reshape(3, 1, 1, 1, 1, 1, 1)
    u_ = ar(2).reshape(1, 2, 1, 1, 1, 1, 1)
    wp = ar(12).reshape(1, 1, 12, 1, 1, 1, 1)
    c_ = ar(6).reshape(1, 1, 1, 6, 1, 1, 1)
    pa = ar(2).reshape(1, 1, 1, 1, 2, 1, 1)
    wo = ar(8).reshape(1, 1, 1, 1, 1, 8, 1)
    oc = ar(16).reshape(1, 1, 1, 1, 1, 1, 16)
    i_ = 2 * j_ + u_ - pa
    dw = wp - wo
    t2 = jnp.where((i_ >= 0) & (i_ <= 4) & (dw >= 0) & (dw <= 4),
                   w2[oc, c_, jnp.clip(i_, 0, 4), jnp.clip(dw, 0, 4)], 0.0)
    t2 = t2.reshape(3, 144, 256).astype(bf16)
    b2t = jnp.tile(b2, 16).reshape(1, 256)                   # lane n -> b2[n % 16]

    # pool2 column selection.
    wo = ar(8).reshape(8, 1, 1, 1, 1)
    oc = ar(16).reshape(1, 16, 1, 1, 1)
    hf = ar(2).reshape(1, 1, 2, 1, 1)
    wq = ar(4).reshape(1, 1, 1, 4, 1)
    cc = ar(16).reshape(1, 1, 1, 1, 16)
    sw2 = ((oc == cc) & (wo == 2 * wq + hf)).astype(bf16).reshape(128, 128)

    # fc1: fold torch NCHW flatten (k = c*16 + h*4 + w) into per-h blocks indexed
    # by the kernel's pooled lane order (w*16 + c):  wf1p[h, w*16+c, o].
    wf1p = jnp.transpose(wf1.reshape(120, 16, 4, 4), (2, 3, 1, 0))
    wf1p = wf1p.reshape(4, 64, 120).astype(bf16)

    wf3p = jnp.pad(wf3.T, ((0, 0), (0, 118))).astype(bf16)   # (84, 128) lane-padded
    bf3p = jnp.pad(bf3, (0, 118)).reshape(1, 128)

    return (t1, b1t, sw1, t2, b2t, sw2,
            wf1p, bf1.reshape(1, 120),
            wf2.T.astype(bf16), bf2.reshape(1, 84),
            wf3p, bf3p)


# -----------------------------------------------------------------------------
# Forward wrapper: single fused pallas_call, grid over batch tiles ("parallel").
# -----------------------------------------------------------------------------
def lenet_forward(img, packed, *, tb=None):
    B = img.shape[0]
    x = img.reshape(B, 28, 28).astype(jnp.float32)   # torch: img.view(B, 1, 28, 28)

    if tb is None:
        # Batch-tile: big enough to fill the MXU M dim, small enough for v5e's
        # 16 MiB scoped-VMEM default, and grid >= 2 whenever B >= 2 (v7x 2 TCs).
        tb = min(128, max(1, (B + 1) // 2))
    nblk = (B + tb - 1) // tb
    Bp = nblk * tb
    if Bp != B:
        x = jnp.concatenate([x, jnp.zeros((Bp - B, 28, 28), jnp.float32)], axis=0)
    xq = x.reshape(Bp, 7, 112)   # merge image-row quads into lanes (free relabel)

    weight_specs = [pl.BlockSpec(a.shape, lambda b, nd=a.ndim: (0,) * nd)
                    for a in packed]

    flops_per_img = 2 * (6 * 112 * 576 * 2 + 6 * 288 * 288
                         + 4 * 144 * 256 * 3 + 4 * 128 * 128
                         + 256 * 120 + 120 * 84 + 84 * 128)
    bytes_accessed = (4 * xq.size + 4 * Bp * 128
                      + sum(a.size * a.dtype.itemsize for a in packed))

    out = pl.pallas_call(
        lenet_kernel,
        out_shape=jax.ShapeDtypeStruct((nblk, tb, 128), jnp.float32),
        grid=(nblk,),
        in_specs=[pl.BlockSpec((tb, 7, 112), lambda b: (b, 0, 0))] + weight_specs,
        out_specs=pl.BlockSpec((1, tb, 128), lambda b: (b, 0, 0)),
        compiler_params=pltpu.CompilerParams(dimension_semantics=("parallel",)),
        cost_estimate=pl.CostEstimate(flops=Bp * flops_per_img, transcendentals=0,
                                      bytes_accessed=bytes_accessed),
    )(xq, *packed)

    return out.reshape(Bp, 128)[:B, :10]


# -----------------------------------------------------------------------------
# Deterministic parameter init (PyTorch default: U(-1/sqrt(fan_in), +..)).
# -----------------------------------------------------------------------------
def init_params(key):
    def uniform(key, shape, fan_in):
        bound = 1.0 / jnp.sqrt(jnp.float32(fan_in))
        return jax.random.uniform(key, shape, jnp.float32, -bound, bound)

    keys = jax.random.split(key, 10)
    return {
        "w1": uniform(keys[0], (6, 1, 5, 5), 25), "b1": uniform(keys[1], (6,), 25),
        "w2": uniform(keys[2], (16, 6, 5, 5), 150), "b2": uniform(keys[3], (16,), 150),
        "wf1": uniform(keys[4], (120, 256), 256), "bf1": uniform(keys[5], (120,), 256),
        "wf2": uniform(keys[6], (84, 120), 120), "bf2": uniform(keys[7], (84,), 120),
        "wf3": uniform(keys[8], (10, 84), 84), "bf3": uniform(keys[9], (10,), 84),
    }


# -----------------------------------------------------------------------------
# Plain-JAX reference (torch semantics) for a numerical sanity check.
# -----------------------------------------------------------------------------
def lenet_reference(img, p):
    hi = jax.lax.Precision.HIGHEST
    B = img.shape[0]
    y = img.reshape(B, 1, 28, 28).astype(jnp.float32)
    y = jax.lax.conv(y, p["w1"], (1, 1), "VALID", precision=hi)
    y = jnp.maximum(y + p["b1"][None, :, None, None], 0.0)
    y = jax.lax.reduce_window(y, -jnp.inf, jax.lax.max, (1, 1, 2, 2), (1, 1, 2, 2), "VALID")
    y = jax.lax.conv(y, p["w2"], (1, 1), "VALID", precision=hi)
    y = jnp.maximum(y + p["b2"][None, :, None, None], 0.0)
    y = jax.lax.reduce_window(y, -jnp.inf, jax.lax.max, (1, 1, 2, 2), (1, 1, 2, 2), "VALID")
    y = y.reshape(B, 16 * 4 * 4)                              # torch NCHW flatten order
    y = jnp.maximum(jnp.dot(y, p["wf1"].T, precision=hi) + p["bf1"], 0.0)
    y = jnp.maximum(jnp.dot(y, p["wf2"].T, precision=hi) + p["bf2"], 0.0)
    return jnp.dot(y, p["wf3"].T, precision=hi) + p["bf3"]


if __name__ == "__main__":
    key = jax.random.PRNGKey(0)
    k_param, k_input = jax.random.split(key)
    params = init_params(k_param)
    packed = pack_params(params)                 # one-time weight packing

    fwd = jax.jit(lenet_forward)

    # Primary check: small batch consistent with the module (28x28 images).
    x = jax.random.normal(k_input, (2, 1, 28, 28), jnp.float32)
    out = jax.block_until_ready(fwd(x, packed))
    assert out.shape == (2, 10) and out.dtype == jnp.float32
    ref = jax.block_until_ready(lenet_reference(x, params))
    max_err = float(jnp.max(jnp.abs(out - ref)))
    # bf16 MXU operands with f32 accumulation: allow a little slack vs f32 ref.
    assert max_err < 5e-2, f"mismatch vs reference: max abs err = {max_err}"

    # Secondary smoke test: exercises multi-image tiles and batch padding (B=5 -> Bp=6).
    x2 = jax.random.normal(jax.random.PRNGKey(1), (5, 1, 28, 28), jnp.float32)
    out2 = jax.block_until_ready(fwd(x2, packed))
    ref2 = jax.block_until_ready(lenet_reference(x2, params))
    max_err2 = float(jnp.max(jnp.abs(out2 - ref2)))
    assert out2.shape == (5, 10) and max_err2 < 5e-2, \
        f"mismatch vs reference (B=5): max abs err = {max_err2}"

    print("KERNEL_OK")
</pallas_src>

<mosaic_0001>
module attributes {stable_mosaic.version = 11 : i64} {
  func.func @lenet_kernel(%arg0: i32, %arg1: memref<1x7x112xf32, #tpu.memory_space<vmem>>, %arg2: memref<2x112x576xbf16, #tpu.memory_space<vmem>>, %arg3: memref<1x576xf32, #tpu.memory_space<vmem>>, %arg4: memref<288x288xbf16, #tpu.memory_space<vmem>>, %arg5: memref<3x144x256xbf16, #tpu.memory_space<vmem>>, %arg6: memref<1x256xf32, #tpu.memory_space<vmem>>, %arg7: memref<128x128xbf16, #tpu.memory_space<vmem>>, %arg8: memref<4x64x120xbf16, #tpu.memory_space<vmem>>, %arg9: memref<1x120xf32, #tpu.memory_space<vmem>>, %arg10: memref<120x84xbf16, #tpu.memory_space<vmem>>, %arg11: memref<1x84xf32, #tpu.memory_space<vmem>>, %arg12: memref<84x128xbf16, #tpu.memory_space<vmem>>, %arg13: memref<1x128xf32, #tpu.memory_space<vmem>>, %arg14: memref<1x1x128xf32, #tpu.memory_space<vmem>>) attributes {dimension_semantics = [#tpu.dimension_semantics<parallel>], iteration_bounds = array<i64: 2>, scalar_prefetch = 0 : i64, scratch_operands = 0 : i64, tpu.core_type = #tpu.core_type<tc>, window_params = [{transform_indices = @transform_0, window_bounds = array<i64: 1, 7, 112>}, {pipeline_mode = #tpu.pipeline_mode<synchronous>, transform_indices = @transform_1, window_bounds = array<i64: 2, 112, 576>}, {pipeline_mode = #tpu.pipeline_mode<synchronous>, transform_indices = @transform_2, window_bounds = array<i64: 1, 576>}, {pipeline_mode = #tpu.pipeline_mode<synchronous>, transform_indices = @transform_3, window_bounds = array<i64: 288, 288>}, {pipeline_mode = #tpu.pipeline_mode<synchronous>, transform_indices = @transform_4, window_bounds = array<i64: 3, 144, 256>}, {pipeline_mode = #tpu.pipeline_mode<synchronous>, transform_indices = @transform_5, window_bounds = array<i64: 1, 256>}, {pipeline_mode = #tpu.pipeline_mode<synchronous>, transform_indices = @transform_6, window_bounds = array<i64: 128, 128>}, {pipeline_mode = #tpu.pipeline_mode<synchronous>, transform_indices = @transform_7, window_bounds = array<i64: 4, 64, 120>}, {pipeline_mode = #tpu.pipeline_mode<synchronous>, transform_indices = @transform_8, window_bounds = array<i64: 1, 120>}, {pipeline_mode = #tpu.pipeline_mode<synchronous>, transform_indices = @transform_9, window_bounds = array<i64: 120, 84>}, {pipeline_mode = #tpu.pipeline_mode<synchronous>, transform_indices = @transform_10, window_bounds = array<i64: 1, 84>}, {pipeline_mode = #tpu.pipeline_mode<synchronous>, transform_indices = @transform_11, window_bounds = array<i64: 84, 128>}, {pipeline_mode = #tpu.pipeline_mode<synchronous>, transform_indices = @transform_12, window_bounds = array<i64: 1, 128>}, {transform_indices = @transform_13, window_bounds = array<i64: 1, 1, 128>}]} {
    %c0 = arith.constant 0 : index
    %c0_0 = arith.constant 0 : index
    %c0_1 = arith.constant 0 : index
    %0 = vector.load %arg1[%c0, %c0_0, %c0_1] : memref<1x7x112xf32, #tpu.memory_space<vmem>>, vector<1x6x112xf32>
    %1 = arith.truncf %0 : vector<1x6x112xf32> to vector<1x6x112xbf16>
    %2 = vector.shape_cast %1 : vector<1x6x112xbf16> to vector<6x112xbf16>
    %c0_2 = arith.constant 0 : index
    %c1 = arith.constant 1 : index
    %c0_3 = arith.constant 0 : index
    %3 = vector.load %arg1[%c0_2, %c1, %c0_3] : memref<1x7x112xf32, #tpu.memory_space<vmem>>, vector<1x6x112xf32>
    %4 = arith.truncf %3 : vector<1x6x112xf32> to vector<1x6x112xbf16>
    %5 = vector.shape_cast %4 : vector<1x6x112xbf16> to vector<6x112xbf16>
    %c0_4 = arith.constant 0 : index
    %c0_5 = arith.constant 0 : index
    %c0_6 = arith.constant 0 : index
    %6 = vector.load %arg2[%c0_4, %c0_5, %c0_6] : memref<2x112x576xbf16, #tpu.memory_space<vmem>>, vector<1x112x576xbf16>
    %7 = vector.shape_cast %6 : vector<1x112x576xbf16> to vector<112x576xbf16>
    %cst = arith.constant dense<0.000000e+00> : vector<6x576xf32>
    %8 = tpu.matmul %2, %7, %cst {dimension_numbers = #tpu.dot_dimension_numbers<[1], [0], [0], [1], [0, 0, 1, 1], [], []>} : vector<6x112xbf16>, vector<112x576xbf16>, vector<6x576xf32> -> vector<6x576xf32>
    %c1_7 = arith.constant 1 : index
    %c0_8 = arith.constant 0 : index
    %c0_9 = arith.constant 0 : index
    %9 = vector.load %arg2[%c1_7, %c0_8, %c0_9] : memref<2x112x576xbf16, #tpu.memory_space<vmem>>, vector<1x112x576xbf16>
    %10 = vector.shape_cast %9 : vector<1x112x576xbf16> to vector<112x576xbf16>
    %cst_10 = arith.constant dense<0.000000e+00> : vector<6x576xf32>
    %11 = tpu.matmul %5, %10, %cst_10 {dimension_numbers = #tpu.dot_dimension_numbers<[1], [0], [0], [1], [0, 0, 1, 1], [], []>} : vector<6x112xbf16>, vector<112x576xbf16>, vector<6x576xf32> -> vector<6x576xf32>
    %12 = arith.addf %8, %11 : vector<6x576xf32>
    %c0_11 = arith.constant 0 : index
    %c0_12 = arith.constant 0 : index
    %13 = vector.load %arg3[%c0_11, %c0_12] : memref<1x576xf32, #tpu.memory_space<vmem>>, vector<1x576xf32>
    %14 = vector.broadcast %13 : vector<1x576xf32> to vector<6x576xf32>
    %15 = arith.addf %12, %14 : vector<6x576xf32>
    %cst_13 = arith.constant 0.000000e+00 : f32
    %16 = vector.broadcast %cst_13 : f32 to vector<6x576xf32>
    %17 = arith.maximumf %15, %16 : vector<6x576xf32>
    %18 = vector.extract_strided_slice %17 {offsets = [0, 0], sizes = [6, 288], strides = [1, 1]} : vector<6x576xf32> to vector<6x288xf32>
    %19 = vector.extract_strided_slice %17 {offsets = [0, 288], sizes = [6, 288], strides = [1, 1]} : vector<6x576xf32> to vector<6x288xf32>
    %20 = arith.maximumf %18, %19 : vector<6x288xf32>
    %21 = arith.truncf %20 : vector<6x288xf32> to vector<6x288xbf16>
    %c0_14 = arith.constant 0 : index
    %c0_15 = arith.constant 0 : index
    %22 = vector.load %arg4[%c0_14, %c0_15] : memref<288x288xbf16, #tpu.memory_space<vmem>>, vector<288x288xbf16>
    %cst_16 = arith.constant dense<0.000000e+00> : vector<6x288xf32>
    %23 = tpu.matmul %21, %22, %cst_16 {dimension_numbers = #tpu.dot_dimension_numbers<[1], [0], [0], [1], [0, 0, 1, 1], [], []>} : vector<6x288xbf16>, vector<288x288xbf16>, vector<6x288xf32> -> vector<6x288xf32>
    %24 = vector.extract_strided_slice %23 {offsets = [0, 0], sizes = [6, 144], strides = [1, 1]} : vector<6x288xf32> to vector<6x144xf32>
    %25 = vector.extract_strided_slice %23 {offsets = [0, 144], sizes = [6, 144], strides = [1, 1]} : vector<6x288xf32> to vector<6x144xf32>
    %26 = arith.maximumf %24, %25 : vector<6x144xf32>
    %27 = arith.truncf %26 : vector<6x144xf32> to vector<6x144xbf16>
    %28 = vector.shape_cast %27 : vector<6x144xbf16> to vector<1x6x144xbf16>
    %29 = vector.extract_strided_slice %28 {offsets = [0, 0, 0], sizes = [1, 4, 144], strides = [1, 1, 1]} : vector<1x6x144xbf16> to vector<1x4x144xbf16>
    %30 = vector.shape_cast %29 : vector<1x4x144xbf16> to vector<4x144xbf16>
    %c0_17 = arith.constant 0 : index
    %c0_18 = arith.constant 0 : index
    %c0_19 = arith.constant 0 : index
    %31 = vector.load %arg5[%c0_17, %c0_18, %c0_19] : memref<3x144x256xbf16, #tpu.memory_space<vmem>>, vector<1x144x256xbf16>
    %32 = vector.shape_cast %31 : vector<1x144x256xbf16> to vector<144x256xbf16>
    %cst_20 = arith.constant dense<0.000000e+00> : vector<4x256xf32>
    %33 = tpu.matmul %30, %32, %cst_20 {dimension_numbers = #tpu.dot_dimension_numbers<[1], [0], [0], [1], [0, 0, 1, 1], [], []>} : vector<4x144xbf16>, vector<144x256xbf16>, vector<4x256xf32> -> vector<4x256xf32>
    %34 = vector.extract_strided_slice %28 {offsets = [0, 1, 0], sizes = [1, 4, 144], strides = [1, 1, 1]} : vector<1x6x144xbf16> to vector<1x4x144xbf16>
    %35 = vector.shape_cast %34 : vector<1x4x144xbf16> to vector<4x144xbf16>
    %c1_21 = arith.constant 1 : index
    %c0_22 = arith.constant 0 : index
    %c0_23 = arith.constant 0 : index
    %36 = vector.load %arg5[%c1_21, %c0_22, %c0_23] : memref<3x144x256xbf16, #tpu.memory_space<vmem>>, vector<1x144x256xbf16>
    %37 = vector.shape_cast %36 : vector<1x144x256xbf16> to vector<144x256xbf16>
    %cst_24 = arith.constant dense<0.000000e+00> : vector<4x256xf32>
    %38 = tpu.matmul %35, %37, %cst_24 {dimension_numbers = #tpu.dot_dimension_numbers<[1], [0], [0], [1], [0, 0, 1, 1], [], []>} : vector<4x144xbf16>, vector<144x256xbf16>, vector<4x256xf32> -> vector<4x256xf32>
    %39 = arith.addf %33, %38 : vector<4x256xf32>
    %40 = vector.extract_strided_slice %28 {offsets = [0, 2, 0], sizes = [1, 4, 144], strides = [1, 1, 1]} : vector<1x6x144xbf16> to vector<1x4x144xbf16>
    %41 = vector.shape_cast %40 : vector<1x4x144xbf16> to vector<4x144xbf16>
    %c2 = arith.constant 2 : index
    %c0_25 = arith.constant 0 : index
    %c0_26 = arith.constant 0 : index
    %42 = vector.load %arg5[%c2, %c0_25, %c0_26] : memref<3x144x256xbf16, #tpu.memory_space<vmem>>, vector<1x144x256xbf16>
    %43 = vector.shape_cast %42 : vector<1x144x256xbf16> to vector<144x256xbf16>
    %cst_27 = arith.constant dense<0.000000e+00> : vector<4x256xf32>
    %44 = tpu.matmul %41, %43, %cst_27 {dimension_numbers = #tpu.dot_dimension_numbers<[1], [0], [0], [1], [0, 0, 1, 1], [], []>} : vector<4x144xbf16>, vector<144x256xbf16>, vector<4x256xf32> -> vector<4x256xf32>
    %45 = arith.addf %39, %44 : vector<4x256xf32>
    %c0_28 = arith.constant 0 : index
    %c0_29 = arith.constant 0 : index
    %46 = vector.load %arg6[%c0_28, %c0_29] : memref<1x256xf32, #tpu.memory_space<vmem>>, vector<1x256xf32>
    %47 = vector.broadcast %46 : vector<1x256xf32> to vector<4x256xf32>
    %48 = arith.addf %45, %47 : vector<4x256xf32>
    %cst_30 = arith.constant 0.000000e+00 : f32
    %49 = vector.broadcast %cst_30 : f32 to vector<4x256xf32>
    %50 = arith.maximumf %48, %49 : vector<4x256xf32>
    %51 = vector.extract_strided_slice %50 {offsets = [0, 0], sizes = [4, 128], strides = [1, 1]} : vector<4x256xf32> to vector<4x128xf32>
    %52 = vector.extract_strided_slice %50 {offsets = [0, 128], sizes = [4, 128], strides = [1, 1]} : vector<4x256xf32> to vector<4x128xf32>
    %53 = arith.maximumf %51, %52 : vector<4x128xf32>
    %54 = arith.truncf %53 : vector<4x128xf32> to vector<4x128xbf16>
    %c0_31 = arith.constant 0 : index
    %c0_32 = arith.constant 0 : index
    %55 = vector.load %arg7[%c0_31, %c0_32] : memref<128x128xbf16, #tpu.memory_space<vmem>>, vector<128x128xbf16>
    %cst_33 = arith.constant dense<0.000000e+00> : vector<4x128xf32>
    %56 = tpu.matmul %54, %55, %cst_33 {dimension_numbers = #tpu.dot_dimension_numbers<[1], [0], [0], [1], [0, 0, 1, 1], [], []>} : vector<4x128xbf16>, vector<128x128xbf16>, vector<4x128xf32> -> vector<4x128xf32>
    %57 = vector.extract_strided_slice %56 {offsets = [0, 0], sizes = [4, 64], strides = [1, 1]} : vector<4x128xf32> to vector<4x64xf32>
    %58 = vector.extract_strided_slice %56 {offsets = [0, 64], sizes = [4, 64], strides = [1, 1]} : vector<4x128xf32> to vector<4x64xf32>
    %59 = arith.maximumf %57, %58 : vector<4x64xf32>
    %60 = arith.truncf %59 : vector<4x64xf32> to vector<4x64xbf16>
    %61 = vector.shape_cast %60 : vector<4x64xbf16> to vector<1x4x64xbf16>
    %62 = vector.extract_strided_slice %61 {offsets = [0, 0, 0], sizes = [1, 1, 64], strides = [1, 1, 1]} : vector<1x4x64xbf16> to vector<1x1x64xbf16>
    %63 = vector.shape_cast %62 : vector<1x1x64xbf16> to vector<1x64xbf16>
    %c0_34 = arith.constant 0 : index
    %c0_35 = arith.constant 0 : index
    %c0_36 = arith.constant 0 : index
    %64 = vector.load %arg8[%c0_34, %c0_35, %c0_36] : memref<4x64x120xbf16, #tpu.memory_space<vmem>>, vector<1x64x120xbf16>
    %65 = vector.shape_cast %64 : vector<1x64x120xbf16> to vector<64x120xbf16>
    %cst_37 = arith.constant dense<0.000000e+00> : vector<1x120xf32>
    %66 = tpu.matmul %63, %65, %cst_37 {dimension_numbers = #tpu.dot_dimension_numbers<[1], [0], [0], [1], [0, 0, 1, 1], [], []>} : vector<1x64xbf16>, vector<64x120xbf16>, vector<1x120xf32> -> vector<1x120xf32>
    %67 = vector.extract_strided_slice %61 {offsets = [0, 1, 0], sizes = [1, 1, 64], strides = [1, 1, 1]} : vector<1x4x64xbf16> to vector<1x1x64xbf16>
    %68 = vector.shape_cast %67 : vector<1x1x64xbf16> to vector<1x64xbf16>
    %c1_38 = arith.constant 1 : index
    %c0_39 = arith.constant 0 : index
    %c0_40 = arith.constant 0 : index
    %69 = vector.load %arg8[%c1_38, %c0_39, %c0_40] : memref<4x64x120xbf16, #tpu.memory_space<vmem>>, vector<1x64x120xbf16>
    %70 = vector.shape_cast %69 : vector<1x64x120xbf16> to vector<64x120xbf16>
    %cst_41 = arith.constant dense<0.000000e+00> : vector<1x120xf32>
    %71 = tpu.matmul %68, %70, %cst_41 {dimension_numbers = #tpu.dot_dimension_numbers<[1], [0], [0], [1], [0, 0, 1, 1], [], []>} : vector<1x64xbf16>, vector<64x120xbf16>, vector<1x120xf32> -> vector<1x120xf32>
    %72 = arith.addf %66, %71 : vector<1x120xf32>
    %73 = vector.extract_strided_slice %61 {offsets = [0, 2, 0], sizes = [1, 1, 64], strides = [1, 1, 1]} : vector<1x4x64xbf16> to vector<1x1x64xbf16>
    %74 = vector.shape_cast %73 : vector<1x1x64xbf16> to vector<1x64xbf16>
    %c2_42 = arith.constant 2 : index
    %c0_43 = arith.constant 0 : index
    %c0_44 = arith.constant 0 : index
    %75 = vector.load %arg8[%c2_42, %c0_43, %c0_44] : memref<4x64x120xbf16, #tpu.memory_space<vmem>>, vector<1x64x120xbf16>
    %76 = vector.shape_cast %75 : vector<1x64x120xbf16> to vector<64x120xbf16>
    %cst_45 = arith.constant dense<0.000000e+00> : vector<1x120xf32>
    %77 = tpu.matmul %74, %76, %cst_45 {dimension_numbers = #tpu.dot_dimension_numbers<[1], [0], [0], [1], [0, 0, 1, 1], [], []>} : vector<1x64xbf16>, vector<64x120xbf16>, vector<1x120xf32> -> vector<1x120xf32>
    %78 = arith.addf %72, %77 : vector<1x120xf32>
    %79 = vector.extract_strided_slice %61 {offsets = [0, 3, 0], sizes = [1, 1, 64], strides = [1, 1, 1]} : vector<1x4x64xbf16> to vector<1x1x64xbf16>
    %80 = vector.shape_cast %79 : vector<1x1x64xbf16> to vector<1x64xbf16>
    %c3 = arith.constant 3 : index
    %c0_46 = arith.constant 0 : index
    %c0_47 = arith.constant 0 : index
    %81 = vector.load %arg8[%c3, %c0_46, %c0_47] : memref<4x64x120xbf16, #tpu.memory_space<vmem>>, vector<1x64x120xbf16>
    %82 = vector.shape_cast %81 : vector<1x64x120xbf16> to vector<64x120xbf16>
    %cst_48 = arith.constant dense<0.000000e+00> : vector<1x120xf32>
    %83 = tpu.matmul %80, %82, %cst_48 {dimension_numbers = #tpu.dot_dimension_numbers<[1], [0], [0], [1], [0, 0, 1, 1], [], []>} : vector<1x64xbf16>, vector<64x120xbf16>, vector<1x120xf32> -> vector<1x120xf32>
    %84 = arith.addf %78, %83 : vector<1x120xf32>
    %c0_49 = arith.constant 0 : index
    %c0_50 = arith.constant 0 : index
    %85 = vector.load %arg9[%c0_49, %c0_50] : memref<1x120xf32, #tpu.memory_space<vmem>>, vector<1x120xf32>
    %86 = arith.addf %84, %85 : vector<1x120xf32>
    %cst_51 = arith.constant 0.000000e+00 : f32
    %87 = vector.broadcast %cst_51 : f32 to vector<1x120xf32>
    %88 = arith.maximumf %86, %87 : vector<1x120xf32>
    %89 = arith.truncf %88 : vector<1x120xf32> to vector<1x120xbf16>
    %c0_52 = arith.constant 0 : index
    %c0_53 = arith.constant 0 : index
    %90 = vector.load %arg10[%c0_52, %c0_53] : memref<120x84xbf16, #tpu.memory_space<vmem>>, vector<120x84xbf16>
    %cst_54 = arith.constant dense<0.000000e+00> : vector<1x84xf32>
    %91 = tpu.matmul %89, %90, %cst_54 {dimension_numbers = #tpu.dot_dimension_numbers<[1], [0], [0], [1], [0, 0, 1, 1], [], []>} : vector<1x120xbf16>, vector<120x84xbf16>, vector<1x84xf32> -> vector<1x84xf32>
    %c0_55 = arith.constant 0 : index
    %c0_56 = arith.constant 0 : index
    %92 = vector.load %arg11[%c0_55, %c0_56] : memref<1x84xf32, #tpu.memory_space<vmem>>, vector<1x84xf32>
    %93 = arith.addf %91, %92 : vector<1x84xf32>
    %cst_57 = arith.constant 0.000000e+00 : f32
    %94 = vector.broadcast %cst_57 : f32 to vector<1x84xf32>
    %95 = arith.maximumf %93, %94 : vector<1x84xf32>
    %96 = arith.truncf %95 : vector<1x84xf32> to vector<1x84xbf16>
    %c0_58 = arith.constant 0 : index
    %c0_59 = arith.constant 0 : index
    %97 = vector.load %arg12[%c0_58, %c0_59] : memref<84x128xbf16, #tpu.memory_space<vmem>>, vector<84x128xbf16>
    %cst_60 = arith.constant dense<0.000000e+00> : vector<1x128xf32>
    %98 = tpu.matmul %96, %97, %cst_60 {dimension_numbers = #tpu.dot_dimension_numbers<[1], [0], [0], [1], [0, 0, 1, 1], [], []>} : vector<1x84xbf16>, vector<84x128xbf16>, vector<1x128xf32> -> vector<1x128xf32>
    %c0_61 = arith.constant 0 : index
    %c0_62 = arith.constant 0 : index
    %99 = vector.load %arg13[%c0_61, %c0_62] : memref<1x128xf32, #tpu.memory_space<vmem>>, vector<1x128xf32>
    %100 = arith.addf %98, %99 : vector<1x128xf32>
    %c0_63 = arith.constant 0 : index
    %c0_64 = arith.constant 0 : index
    %c0_65 = arith.constant 0 : index
    %101 = vector.load %arg14[%c0_63, %c0_64, %c0_65] : memref<1x1x128xf32, #tpu.memory_space<vmem>>, vector<1x1x128xf32>
    %102 = vector.shape_cast %101 : vector<1x1x128xf32> to vector<1x128xf32>
    %103 = vector.shape_cast %100 : vector<1x128xf32> to vector<1x1x128xf32>
    tpu.vector_store %arg14[%c0_63, %c0_64, %c0_65], %103 {strides = array<i32>} : memref<1x1x128xf32, #tpu.memory_space<vmem>>, vector<1x1x128xf32>,
    return
  }
  func.func @transform_0(%arg0: i32) -> (i32, i32, i32) {
    %c0_i32 = arith.constant 0 : i32
    %c0_i32_0 = arith.constant 0 : i32
    %c0_i32_1 = arith.constant 0 : i32
    return %arg0, %c0_i32, %c0_i32_0 : i32, i32, i32
  }
  func.func @transform_1(%arg0: i32) -> (i32, i32, i32) {
    %c0_i32 = arith.constant 0 : i32
    %c0_i32_0 = arith.constant 0 : i32
    %c0_i32_1 = arith.constant 0 : i32
    %c0_i32_2 = arith.constant 0 : i32
    return %c0_i32, %c0_i32_0, %c0_i32_1 : i32, i32, i32
  }
  func.func @transform_2(%arg0: i32) -> (i32, i32) {
    %c0_i32 = arith.constant 0 : i32
    %c0_i32_0 = arith.constant 0 : i32
    %c0_i32_1 = arith.constant 0 : i32
    return %c0_i32, %c0_i32_0 : i32, i32
  }
  func.func @transform_3(%arg0: i32) -> (i32, i32) {
    %c0_i32 = arith.constant 0 : i32
    %c0_i32_0 = arith.constant 0 : i32
    %c0_i32_1 = arith.constant 0 : i32
    return %c0_i32, %c0_i32_0 : i32, i32
  }
  func.func @transform_4(%arg0: i32) -> (i32, i32, i32) {
    %c0_i32 = arith.constant 0 : i32
    %c0_i32_0 = arith.constant 0 : i32
    %c0_i32_1 = arith.constant 0 : i32
    %c0_i32_2 = arith.constant 0 : i32
    return %c0_i32, %c0_i32_0, %c0_i32_1 : i32, i32, i32
  }
  func.func @transform_5(%arg0: i32) -> (i32, i32) {
    %c0_i32 = arith.constant 0 : i32
    %c0_i32_0 = arith.constant 0 : i32
    %c0_i32_1 = arith.constant 0 : i32
    return %c0_i32, %c0_i32_0 : i32, i32
  }
  func.func @transform_6(%arg0: i32) -> (i32, i32) {
    %c0_i32 = arith.constant 0 : i32
    %c0_i32_0 = arith.constant 0 : i32
    %c0_i32_1 = arith.constant 0 : i32
    return %c0_i32, %c0_i32_0 : i32, i32
  }
  func.func @transform_7(%arg0: i32) -> (i32, i32, i32) {
    %c0_i32 = arith.constant 0 : i32
    %c0_i32_0 = arith.constant 0 : i32
    %c0_i32_1 = arith.constant 0 : i32
    %c0_i32_2 = arith.constant 0 : i32
    return %c0_i32, %c0_i32_0, %c0_i32_1 : i32, i32, i32
  }
  func.func @transform_8(%arg0: i32) -> (i32, i32) {
    %c0_i32 = arith.constant 0 : i32
    %c0_i32_0 = arith.constant 0 : i32
    %c0_i32_1 = arith.constant 0 : i32
    return %c0_i32, %c0_i32_0 : i32, i32
  }
  func.func @transform_9(%arg0: i32) -> (i32, i32) {
    %c0_i32 = arith.constant 0 : i32
    %c0_i32_0 = arith.constant 0 : i32
    %c0_i32_1 = arith.constant 0 : i32
    return %c0_i32, %c0_i32_0 : i32, i32
  }
  func.func @transform_10(%arg0: i32) -> (i32, i32) {
    %c0_i32 = arith.constant 0 : i32
    %c0_i32_0 = arith.constant 0 : i32
    %c0_i32_1 = arith.constant 0 : i32
    return %c0_i32, %c0_i32_0 : i32, i32
  }
  func.func @transform_11(%arg0: i32) -> (i32, i32) {
    %c0_i32 = arith.constant 0 : i32
    %c0_i32_0 = arith.constant 0 : i32
    %c0_i32_1 = arith.constant 0 : i32
    return %c0_i32, %c0_i32_0 : i32, i32
  }
  func.func @transform_12(%arg0: i32) -> (i32, i32) {
    %c0_i32 = arith.constant 0 : i32
    %c0_i32_0 = arith.constant 0 : i32
    %c0_i32_1 = arith.constant 0 : i32
    return %c0_i32, %c0_i32_0 : i32, i32
  }
  func.func @transform_13(%arg0: i32) -> (i32, i32, i32) {
    %c0_i32 = arith.constant 0 : i32
    %c0_i32_0 = arith.constant 0 : i32
    %c0_i32_1 = arith.constant 0 : i32
    return %arg0, %c0_i32, %c0_i32_0 : i32, i32, i32
  }
}

</mosaic_0001>

<llo_original>
// kernel: lenet_forward.1
$region0: #{lenet_forward.1}
  #allocation0 [shape = 'u32[]', space=smem, size = 0x4, offset = 0x4, fixed_abs, tag = 'smem constant byte address 0x4 - core index']
  #allocation1 [shape = 'u32[144,128]{1,0:T(1,128)}', space=vmem, size = 0x12000, scoped, tag = 'internal scratch']
  %s0 = inlined_call_operand.vmem [shape: f32[2,7,112], index: 0, kind: input, shape index: {}]
  %s1 = inlined_call_operand.hbm [shape: bf16[2,112,576], index: 1, kind: input, shape index: {}]
  %s2 = inlined_call_operand.vmem [shape: f32[1,576], index: 2, kind: input, shape index: {}]
  %s3 = inlined_call_operand.hbm [shape: bf16[288,288], index: 3, kind: input, shape index: {}]
  %s4 = inlined_call_operand.hbm [shape: bf16[3,144,256], index: 4, kind: input, shape index: {}]
  %s5 = inlined_call_operand.vmem [shape: f32[1,256], index: 5, kind: input, shape index: {}]
  %s6 = inlined_call_operand.vmem [shape: bf16[128,128], index: 6, kind: input, shape index: {}]
  %s7 = inlined_call_operand.vmem [shape: bf16[4,64,120], index: 7, kind: input, shape index: {}]
  %s8 = inlined_call_operand.vmem [shape: f32[1,120], index: 8, kind: input, shape index: {}]
  %s9 = inlined_call_operand.vmem [shape: bf16[120,84], index: 9, kind: input, shape index: {}]
  %s10 = inlined_call_operand.vmem [shape: f32[1,84], index: 10, kind: input, shape index: {}]
  %s11 = inlined_call_operand.vmem [shape: bf16[84,128], index: 11, kind: input, shape index: {}]
  %s12 = inlined_call_operand.vmem [shape: f32[1,128], index: 12, kind: input, shape index: {}]
  %s13 = inlined_call_operand.hbm [shape: f32[2,1,128], index: 13, kind: output, shape index: {}]
  %s14 = sld [smem:[#allocation0]]
  $region97: #{lenet_forward.1} parent=0
    _
  %s16 = ssub.s32 1, %s14
  %s17 = scalar_select 0, %s16, %s14
  $region1: #{lenet_forward.1} parent=0
    #allocation2 [shape = 'u8[286720]{0}', space=vmem, size = 0x46000, scoped, tag = 'input window, operand 1, single buffered']
    #allocation3 [shape = 's32[2]{0}', space=sflag, size = 0x8, scoped, tag = 'scoped memory for lenet_forward.1']
    #allocation4 [shape = 's32[2]{0}', space=sflag, size = 0x8, scoped, tag = 'scoped memory for lenet_forward.1']
    #allocation5 [shape = 'u8[221184]{0}', space=vmem, size = 0x36000, scoped, tag = 'input window, operand 3, single buffered']
    #allocation6 [shape = 's32[1]{0}', space=sflag, size = 0x4, scoped, tag = 'scoped memory for lenet_forward.1']
    #allocation7 [shape = 'u8[221184]{0}', space=vmem, size = 0x36000, scoped, tag = 'input window, operand 4, single buffered']
    #allocation8 [shape = 'u8[1024]{0}', space=vmem, size = 0x400, scoped, tag = 'output window, operand 0']
    %18 = vsyncpa [#allocation3], 0
    %19 = vsyncpa [#allocation6], 0
    %20 = vsyncpa [#allocation4], 0
    %s21 = scalar_lea.sflag [#allocation4], 1
    %22 = vsyncpa %s21, 0
    loop: start=0, step=1, limit=4
    $region2: #{lenet_forward.1} parent=1 // loop_pre_header
      _
    $region3: #{lenet_forward.1} parent=1 // loop_header
      %s24 = sphi 0, %s28
      %p25 = scmp.ge.s32.totalorder %s24, 4
      %s34 = sphi 0, %s36
      %s37 = sphi 0, %s34
      %s38 = sphi 0, %s37
      %s54 = sphi 0, %s38
      %s58 = sphi 0, %s58
      %s60 = sphi 0, %s58
      %s61 = sphi 0, %s60
      %s75 = sphi 0, %s61
      %s79 = sphi 0, %s79
      %s81 = sphi 0, %s79
      %s82 = sphi 0, %s81
      %s96 = sphi 0, %s82
      %s100 = sphi 0, %s100
      %s102 = sphi 0, %s100
      %s103 = sphi 0, %s102
      %s117 = sphi 0, %s103
      %s121 = sphi 0, %s121
      %s123 = sphi 0, %s121
      %s124 = sphi 0, %s123
      %s138 = sphi 0, %s124
      %s142 = sphi 0, %s142
      %s144 = sphi 0, %s142
      %s145 = sphi 0, %s144
      %s159 = sphi 0, %s145
      %s163 = sphi 0, %s163
      %s165 = sphi 0, %s163
      %s166 = sphi 0, %s165
      %s180 = sphi 0, %s166
      %s184 = sphi 0, %s184
      %s186 = sphi 0, %s184
      %s187 = sphi 0, %s186
      %s201 = sphi 0, %s187
      %s205 = sphi 0, %s205
      %s207 = sphi 0, %s205
      %s208 = sphi 0, %s207
      %s222 = sphi 0, %s208
      %s226 = sphi 0, %s226
      %s228 = sphi 0, %s226
      %s229 = sphi 0, %s228
      %s243 = sphi 0, %s229
      %s247 = sphi 0, %s247
      %s249 = sphi 0, %s247
      %s250 = sphi 0, %s249
      %s264 = sphi 0, %s250
      %s268 = sphi 0, %s268
      %s270 = sphi 0, %s268
      %s271 = sphi 0, %s270
      %s285 = sphi 0, %s271
      %s289 = sphi 0, %s289
      %s291 = sphi 0, %s289
      %s292 = sphi 0, %s291
      %s306 = sphi 0, %s292
      %s312 = sphi 0, %s314
      %s315 = sphi 0, %s312
      %s316 = sphi 0, %s315
      %s332 = sphi 0, %s316
    $region4: #{lenet_forward.1} parent=1 // loop_header_branch
      %27 = sbr.rel (%p25) target = $region8
    $region5: #{lenet_forward.1} parent=1 // loop_body
      %s29 = ssub.s32 %s24, 1
      %s30 = ssub.s32 %s24, 2
      %s31 = sadd.s32 %s24, 1
      %s32 = ssub.s32 %s24, %s31
      %p33 = scmp.eq.s32.totalorder %s32, 0
      %s35 = sadd.s32 %s34, 1
      %s36 = scalar_select %p33, %s34, %s35
      %p39 = pneg %p33
      %p40 = scmp.eq.s32.totalorder %s24, 1
      %p41 = por %p39, %p40
      %p42 = scmp.ne.s32.totalorder %s34, %s37
      %p43 = scmp.eq.s32.totalorder %s24, 0
      %p44 = por %p42, %p43
      %p45 = scmp.ne.s32.totalorder %s34, %s37
      %p46 = scmp.eq.s32.totalorder %s29, 1
      %p47 = por %p45, %p46
      %p48 = scmp.ne.s32.totalorder %s37, %s38
      %p49 = scmp.eq.s32.totalorder %s29, 0
      %p50 = por %p48, %p49
      %p51 = scmp.ne.s32.totalorder %s37, %s38
      %p52 = scmp.eq.s32.totalorder %s30, 1
      %p53 = por %p51, %p52
      %p55 = scmp.ne.s32.totalorder %s38, %s54
      %p56 = scmp.eq.s32.totalorder %s30, 0
      %p57 = por %p55, %p56
      %s59 = sadd.s32 %s58, 1
      %p62 = scmp.eq.s32.totalorder %s24, 1
      %p63 = scmp.ne.s32.totalorder %s58, %s60
      %p64 = scmp.eq.s32.totalorder %s24, 0
      %p65 = por %p63, %p64
      %p66 = scmp.ne.s32.totalorder %s58, %s60
      %p67 = scmp.eq.s32.totalorder %s29, 1
      %p68 = por %p66, %p67
      %p69 = scmp.ne.s32.totalorder %s60, %s61
      %p70 = scmp.eq.s32.totalorder %s29, 0
      %p71 = por %p69, %p70
      %p72 = scmp.ne.s32.totalorder %s60, %s61
      %p73 = scmp.eq.s32.totalorder %s30, 1
      %p74 = por %p72, %p73
      %p76 = scmp.ne.s32.totalorder %s61, %s75
      %p77 = scmp.eq.s32.totalorder %s30, 0
      %p78 = por %p76, %p77
      %s80 = sadd.s32 %s79, 1
      %p83 = scmp.eq.s32.totalorder %s24, 1
      %p84 = scmp.ne.s32.totalorder %s79, %s81
      %p85 = scmp.eq.s32.totalorder %s24, 0
      %p86 = por %p84, %p85
      %p87 = scmp.ne.s32.totalorder %s79, %s81
      %p88 = scmp.eq.s32.totalorder %s29, 1
      %p89 = por %p87, %p88
      %p90 = scmp.ne.s32.totalorder %s81, %s82
      %p91 = scmp.eq.s32.totalorder %s29, 0
      %p92 = por %p90, %p91
      %p93 = scmp.ne.s32.totalorder %s81, %s82
      %p94 = scmp.eq.s32.totalorder %s30, 1
      %p95 = por %p93, %p94
      %p97 = scmp.ne.s32.totalorder %s82, %s96
      %p98 = scmp.eq.s32.totalorder %s30, 0
      %p99 = por %p97, %p98
      %s101 = sadd.s32 %s100, 1
      %p104 = scmp.eq.s32.totalorder %s24, 1
      %p105 = scmp.ne.s32.totalorder %s100, %s102
      %p106 = scmp.eq.s32.totalorder %s24, 0
      %p107 = por %p105, %p106
      %p108 = scmp.ne.s32.totalorder %s100, %s102
      %p109 = scmp.eq.s32.totalorder %s29, 1
      %p110 = por %p108, %p109
      %p111 = scmp.ne.s32.totalorder %s102, %s103
      %p112 = scmp.eq.s32.totalorder %s29, 0
      %p113 = por %p111, %p112
      %p114 = scmp.ne.s32.totalorder %s102, %s103
      %p115 = scmp.eq.s32.totalorder %s30, 1
      %p116 = por %p114, %p115
      %p118 = scmp.ne.s32.totalorder %s103, %s117
      %p119 = scmp.eq.s32.totalorder %s30, 0
      %p120 = por %p118, %p119
      %s122 = sadd.s32 %s121, 1
      %p125 = scmp.eq.s32.totalorder %s24, 1
      %p126 = scmp.ne.s32.totalorder %s121, %s123
      %p127 = scmp.eq.s32.totalorder %s24, 0
      %p128 = por %p126, %p127
      %p129 = scmp.ne.s32.totalorder %s121, %s123
      %p130 = scmp.eq.s32.totalorder %s29, 1
      %p131 = por %p129, %p130
      %p132 = scmp.ne.s32.totalorder %s123, %s124
      %p133 = scmp.eq.s32.totalorder %s29, 0
      %p134 = por %p132, %p133
      %p135 = scmp.ne.s32.totalorder %s123, %s124
      %p136 = scmp.eq.s32.totalorder %s30, 1
      %p137 = por %p135, %p136
      %p139 = scmp.ne.s32.totalorder %s124, %s138
      %p140 = scmp.eq.s32.totalorder %s30, 0
      %p141 = por %p139, %p140
      %s143 = sadd.s32 %s142, 1
      %p146 = scmp.eq.s32.totalorder %s24, 1
      %p147 = scmp.ne.s32.totalorder %s142, %s144
      %p148 = scmp.eq.s32.totalorder %s24, 0
      %p149 = por %p147, %p148
      %p150 = scmp.ne.s32.totalorder %s142, %s144
      %p151 = scmp.eq.s32.totalorder %s29, 1
      %p152 = por %p150, %p151
      %p153 = scmp.ne.s32.totalorder %s144, %s145
      %p154 = scmp.eq.s32.totalorder %s29, 0
      %p155 = por %p153, %p154
      %p156 = scmp.ne.s32.totalorder %s144, %s145
      %p157 = scmp.eq.s32.totalorder %s30, 1
      %p158 = por %p156, %p157
      %p160 = scmp.ne.s32.totalorder %s145, %s159
      %p161 = scmp.eq.s32.totalorder %s30, 0
      %p162 = por %p160, %p161
      %s164 = sadd.s32 %s163, 1
      %p167 = scmp.eq.s32.totalorder %s24, 1
      %p168 = scmp.ne.s32.totalorder %s163, %s165
      %p169 = scmp.eq.s32.totalorder %s24, 0
      %p170 = por %p168, %p169
      %p171 = scmp.ne.s32.totalorder %s163, %s165
      %p172 = scmp.eq.s32.totalorder %s29, 1
      %p173 = por %p171, %p172
      %p174 = scmp.ne.s32.totalorder %s165, %s166
      %p175 = scmp.eq.s32.totalorder %s29, 0
      %p176 = por %p174, %p175
      %p177 = scmp.ne.s32.totalorder %s165, %s166
      %p178 = scmp.eq.s32.totalorder %s30, 1
      %p179 = por %p177, %p178
      %p181 = scmp.ne.s32.totalorder %s166, %s180
      %p182 = scmp.eq.s32.totalorder %s30, 0
      %p183 = por %p181, %p182
      %s185 = sadd.s32 %s184, 1
      %p188 = scmp.eq.s32.totalorder %s24, 1
      %p189 = scmp.ne.s32.totalorder %s184, %s186
      %p190 = scmp.eq.s32.totalorder %s24, 0
      %p191 = por %p189, %p190
      %p192 = scmp.ne.s32.totalorder %s184, %s186
      %p193 = scmp.eq.s32.totalorder %s29, 1
      %p194 = por %p192, %p193
      %p195 = scmp.ne.s32.totalorder %s186, %s187
      %p196 = scmp.eq.s32.totalorder %s29, 0
      %p197 = por %p195, %p196
      %p198 = scmp.ne.s32.totalorder %s186, %s187
      %p199 = scmp.eq.s32.totalorder %s30, 1
      %p200 = por %p198, %p199
      %p202 = scmp.ne.s32.totalorder %s187, %s201
      %p203 = scmp.eq.s32.totalorder %s30, 0
      %p204 = por %p202, %p203
      %s206 = sadd.s32 %s205, 1
      %p209 = scmp.eq.s32.totalorder %s24, 1
      %p210 = scmp.ne.s32.totalorder %s205, %s207
      %p211 = scmp.eq.s32.totalorder %s24, 0
      %p212 = por %p210, %p211
      %p213 = scmp.ne.s32.totalorder %s205, %s207
      %p214 = scmp.eq.s32.totalorder %s29, 1
      %p215 = por %p213, %p214
      %p216 = scmp.ne.s32.totalorder %s207, %s208
      %p217 = scmp.eq.s32.totalorder %s29, 0
      %p218 = por %p216, %p217
      %p219 = scmp.ne.s32.totalorder %s207, %s208
      %p220 = scmp.eq.s32.totalorder %s30, 1
      %p221 = por %p219, %p220
      %p223 = scmp.ne.s32.totalorder %s208, %s222
      %p224 = scmp.eq.s32.totalorder %s30, 0
      %p225 = por %p223, %p224
      %s227 = sadd.s32 %s226, 1
      %p230 = scmp.eq.s32.totalorder %s24, 1
      %p231 = scmp.ne.s32.totalorder %s226, %s228
      %p232 = scmp.eq.s32.totalorder %s24, 0
      %p233 = por %p231, %p232
      %p234 = scmp.ne.s32.totalorder %s226, %s228
      %p235 = scmp.eq.s32.totalorder %s29, 1
      %p236 = por %p234, %p235
      %p237 = scmp.ne.s32.totalorder %s228, %s229
      %p238 = scmp.eq.s32.totalorder %s29, 0
      %p239 = por %p237, %p238
      %p240 = scmp.ne.s32.totalorder %s228, %s229
      %p241 = scmp.eq.s32.totalorder %s30, 1
      %p242 = por %p240, %p241
      %p244 = scmp.ne.s32.totalorder %s229, %s243
      %p245 = scmp.eq.s32.totalorder %s30, 0
      %p246 = por %p244, %p245
      %s248 = sadd.s32 %s247, 1
      %p251 = scmp.eq.s32.totalorder %s24, 1
      %p252 = scmp.ne.s32.totalorder %s247, %s249
      %p253 = scmp.eq.s32.totalorder %s24, 0
      %p254 = por %p252, %p253
      %p255 = scmp.ne.s32.totalorder %s247, %s249
      %p256 = scmp.eq.s32.totalorder %s29, 1
      %p257 = por %p255, %p256
      %p258 = scmp.ne.s32.totalorder %s249, %s250
      %p259 = scmp.eq.s32.totalorder %s29, 0
      %p260 = por %p258, %p259
      %p261 = scmp.ne.s32.totalorder %s249, %s250
      %p262 = scmp.eq.s32.totalorder %s30, 1
      %p263 = por %p261, %p262
      %p265 = scmp.ne.s32.totalorder %s250, %s264
      %p266 = scmp.eq.s32.totalorder %s30, 0
      %p267 = por %p265, %p266
      %s269 = sadd.s32 %s268, 1
      %p272 = scmp.eq.s32.totalorder %s24, 1
      %p273 = scmp.ne.s32.totalorder %s268, %s270
      %p274 = scmp.eq.s32.totalorder %s24, 0
      %p275 = por %p273, %p274
      %p276 = scmp.ne.s32.totalorder %s268, %s270
      %p277 = scmp.eq.s32.totalorder %s29, 1
      %p278 = por %p276, %p277
      %p279 = scmp.ne.s32.totalorder %s270, %s271
      %p280 = scmp.eq.s32.totalorder %s29, 0
      %p281 = por %p279, %p280
      %p282 = scmp.ne.s32.totalorder %s270, %s271
      %p283 = scmp.eq.s32.totalorder %s30, 1
      %p284 = por %p282, %p283
      %p286 = scmp.ne.s32.totalorder %s271, %s285
      %p287 = scmp.eq.s32.totalorder %s30, 0
      %p288 = por %p286, %p287
      %s290 = sadd.s32 %s289, 1
      %p293 = scmp.eq.s32.totalorder %s24, 1
      %p294 = scmp.ne.s32.totalorder %s289, %s291
      %p295 = scmp.eq.s32.totalorder %s24, 0
      %p296 = por %p294, %p295
      %p297 = scmp.ne.s32.totalorder %s289, %s291
      %p298 = scmp.eq.s32.totalorder %s29, 1
      %p299 = por %p297, %p298
      %p300 = scmp.ne.s32.totalorder %s291, %s292
      %p301 = scmp.eq.s32.totalorder %s29, 0
      %p302 = por %p300, %p301
      %p303 = scmp.ne.s32.totalorder %s291, %s292
      %p304 = scmp.eq.s32.totalorder %s30, 1
      %p305 = por %p303, %p304
      %p307 = scmp.ne.s32.totalorder %s292, %s306
      %p308 = scmp.eq.s32.totalorder %s30, 0
      %p309 = por %p307, %p308
      %s310 = ssub.s32 %s24, %s31
      %p311 = scmp.eq.s32.totalorder %s310, 0
      %s313 = sadd.s32 %s312, 1
      %s314 = scalar_select %p311, %s312, %s313
      %p317 = pneg %p311
      %p318 = scmp.eq.s32.totalorder %s24, 1
      %p319 = por %p317, %p318
      %p320 = scmp.ne.s32.totalorder %s312, %s315
      %p321 = scmp.eq.s32.totalorder %s24, 0
      %p322 = por %p320, %p321
      %p323 = scmp.ne.s32.totalorder %s312, %s315
      %p324 = scmp.eq.s32.totalorder %s29, 1
      %p325 = por %p323, %p324
      %p326 = scmp.ne.s32.totalorder %s315, %s316
      %p327 = scmp.eq.s32.totalorder %s29, 0
      %p328 = por %p326, %p327
      %p329 = scmp.ne.s32.totalorder %s315, %s316
      %p330 = scmp.eq.s32.totalorder %s30, 1
      %p331 = por %p329, %p330
      %p333 = scmp.ne.s32.totalorder %s316, %s332
      %p334 = scmp.eq.s32.totalorder %s30, 0
      %p335 = por %p333, %p334
      %p336 = scmp.le.s32.totalorder 1, %s24
      %p337 = scmp.lt.s32.totalorder %s24, 3
      %p338 = pnand %p336, %p337
      %p339 = pneg %p338
      // Predicated region
      $region9: #{lenet_forward.1} parent=5 // pred_check
        _
      $region10: #{lenet_forward.1} parent=5 // pred_check_branch
        %341 = sbr.rel (%p338) target = $region12
      $region11: #{lenet_forward.1} parent=5 // pred_region
        %s342 = ssub.s32 %s24, 1
        // Predicated region
        $region13: #{lenet_forward.1} parent=11 // pred_check
          %p343 = pneg %p71
        $region14: #{lenet_forward.1} parent=11 // pred_check_branch
          %345 = sbr.rel (%p343) target = $region16
        $region15: #{lenet_forward.1} parent=11 // pred_region
          %s347 = ssub.s32 8960, 8960
          %348 = vsyncadd [#allocation3], %s347
          %s349 = sshll.u32 [#allocation2], 4
          %s350 = int_to_ptr.vmem [resolvable:$true] %s349
          %355 = dma.hbm_to_vmem [thread:$0]  %s1, 8960, %s350, [#allocation3], 320, 320, 20
        $region16: #{lenet_forward.1} parent=11 // pred_fallthru
          _
        // Predicated region
        $region17: #{lenet_forward.1} parent=11 // pred_check
          %p356 = pneg %p92
        $region18: #{lenet_forward.1} parent=11 // pred_check_branch
          %358 = sbr.rel (%p356) target = $region20
        $region19: #{lenet_forward.1} parent=11 // pred_region
          _
        $region20: #{lenet_forward.1} parent=11 // pred_fallthru
          _
        // Predicated region
        $region21: #{lenet_forward.1} parent=11 // pred_check
          %p359 = pneg %p113
        $region22: #{lenet_forward.1} parent=11 // pred_check_branch
          %361 = sbr.rel (%p359) target = $region24
        $region23: #{lenet_forward.1} parent=11 // pred_region
          %s363 = ssub.s32 6912, 6912
          %364 = vsyncadd [#allocation6], %s363
          %s365 = sshll.u32 [#allocation5], 4
          %s366 = int_to_ptr.vmem [resolvable:$true] %s365
          %371 = dma.hbm_to_vmem [thread:$0]  %s3, 6912, %s366, [#allocation6], 192, 192, 12
        $region24: #{lenet_forward.1} parent=11 // pred_fallthru
          _
        // Predicated region
        $region25: #{lenet_forward.1} parent=11 // pred_check
          %p372 = pneg %p134
        $region26: #{lenet_forward.1} parent=11 // pred_check_branch
          %374 = sbr.rel (%p372) target = $region28
        $region27: #{lenet_forward.1} parent=11 // pred_region
          %s376 = ssub.s32 6912, 6912
          %377 = vsyncadd [#allocation6], %s376
          %s378 = sshll.u32 [#allocation7], 4
          %s379 = int_to_ptr.vmem [resolvable:$true] %s378
          %384 = dma.hbm_to_vmem [thread:$0]  %s4, 6912, %s379, [#allocation6], 128, 128, 8
        $region28: #{lenet_forward.1} parent=11 // pred_fallthru
          _
        // Predicated region
        $region29: #{lenet_forward.1} parent=11 // pred_check
          %p385 = pneg %p155
        $region30: #{lenet_forward.1} parent=11 // pred_check_branch
          %387 = sbr.rel (%p385) target = $region32
        $region31: #{lenet_forward.1} parent=11 // pred_region
          _
        $region32: #{lenet_forward.1} parent=11 // pred_fallthru
          _
        // Predicated region
        $region33: #{lenet_forward.1} parent=11 // pred_check
          %p388 = pneg %p176
        $region34: #{lenet_forward.1} parent=11 // pred_check_branch
          %390 = sbr.rel (%p388) target = $region36
        $region35: #{lenet_forward.1} parent=11 // pred_region
          _
        $region36: #{lenet_forward.1} parent=11 // pred_fallthru
          _
        // Predicated region
        $region37: #{lenet_forward.1} parent=11 // pred_check
          %p391 = pneg %p197
        $region38: #{lenet_forward.1} parent=11 // pred_check_branch
          %393 = sbr.rel (%p391) target = $region40
        $region39: #{lenet_forward.1} parent=11 // pred_region
          _
        $region40: #{lenet_forward.1} parent=11 // pred_fallthru
          _
        // Predicated region
        $region41: #{lenet_forward.1} parent=11 // pred_check
          %p394 = pneg %p218
        $region42: #{lenet_forward.1} parent=11 // pred_check_branch
          %396 = sbr.rel (%p394) target = $region44
        $region43: #{lenet_forward.1} parent=11 // pred_region
          _
        $region44: #{lenet_forward.1} parent=11 // pred_fallthru
          _
        // Predicated region
        $region45: #{lenet_forward.1} parent=11 // pred_check
          %p397 = pneg %p239
        $region46: #{lenet_forward.1} parent=11 // pred_check_branch
          %399 = sbr.rel (%p397) target = $region48
        $region47: #{lenet_forward.1} parent=11 // pred_region
          _
        $region48: #{lenet_forward.1} parent=11 // pred_fallthru
          _
        // Predicated region
        $region49: #{lenet_forward.1} parent=11 // pred_check
          %p400 = pneg %p260
        $region50: #{lenet_forward.1} parent=11 // pred_check_branch
          %402 = sbr.rel (%p400) target = $region52
        $region51: #{lenet_forward.1} parent=11 // pred_region
          _
        $region52: #{lenet_forward.1} parent=11 // pred_fallthru
          _
        // Predicated region
        $region53: #{lenet_forward.1} parent=11 // pred_check
          %p403 = pneg %p281
        $region54: #{lenet_forward.1} parent=11 // pred_check_branch
          %405 = sbr.rel (%p403) target = $region56
        $region55: #{lenet_forward.1} parent=11 // pred_region
          _
        $region56: #{lenet_forward.1} parent=11 // pred_fallthru
          _
        // Predicated region
        $region57: #{lenet_forward.1} parent=11 // pred_check
          %p406 = pneg %p302
        $region58: #{lenet_forward.1} parent=11 // pred_check_branch
          %408 = sbr.rel (%p406) target = $region60
        $region59: #{lenet_forward.1} parent=11 // pred_region
          _
        $region60: #{lenet_forward.1} parent=11 // pred_fallthru
          _
      $region12: #{lenet_forward.1} parent=5 // pred_fallthru
        _
      %p409 = scmp.lt.s32.totalorder %s24, 2
      // Predicated region
      $region61: #{lenet_forward.1} parent=5 // pred_check
        %p410 = pneg %p409
      $region62: #{lenet_forward.1} parent=5 // pred_check_branch
        %412 = sbr.rel (%p410) target = $region64
      $region63: #{lenet_forward.1} parent=5 // pred_region
        // Predicated region
        $region65: #{lenet_forward.1} parent=63 // pred_check
          %p413 = pneg %p44
        $region66: #{lenet_forward.1} parent=63 // pred_check_branch
          %415 = sbr.rel (%p413) target = $region68
        $region67: #{lenet_forward.1} parent=63 // pred_region
          %p416 = scmp.lt.s32.totalorder %s24, 1
          %s417 = scalar_select %p416, %s24, 1
          %s418 = smul.addr %s417, 8
          %s419 = scalar_lea.vmem %s0, %s418
        $region68: #{lenet_forward.1} parent=63 // pred_fallthru
          _
      $region64: #{lenet_forward.1} parent=5 // pred_fallthru
        _
      %p420 = scmp.le.s32.totalorder 1, %s24
      %p421 = scmp.lt.s32.totalorder %s24, 3
      %p422 = pnand %p420, %p421
      %p423 = pneg %p422
      // Predicated region
      $region69: #{lenet_forward.1} parent=5 // pred_check
        _
      $region70: #{lenet_forward.1} parent=5 // pred_check_branch
        %425 = sbr.rel (%p422) target = $region72
      $region71: #{lenet_forward.1} parent=5 // pred_region
        %s426 = ssub.s32 %s24, 1
        // Predicated region
        $region73: #{lenet_forward.1} parent=71 // pred_check
          %p427 = pneg %p71
        $region74: #{lenet_forward.1} parent=71 // pred_check_branch
          %429 = sbr.rel (%p427) target = $region76
        $region75: #{lenet_forward.1} parent=71 // pred_region
          %430 = dma.done [#allocation3], 8960
        $region76: #{lenet_forward.1} parent=71 // pred_fallthru
          _
        // Predicated region
        $region77: #{lenet_forward.1} parent=71 // pred_check
          %p431 = pneg %p113
        $region78: #{lenet_forward.1} parent=71 // pred_check_branch
          %433 = sbr.rel (%p431) target = $region80
        $region79: #{lenet_forward.1} parent=71 // pred_region
          %434 = dma.done [#allocation6], 6912
        $region80: #{lenet_forward.1} parent=71 // pred_fallthru
          _
        // Predicated region
        $region81: #{lenet_forward.1} parent=71 // pred_check
          %p435 = pneg %p134
        $region82: #{lenet_forward.1} parent=71 // pred_check_branch
          %437 = sbr.rel (%p435) target = $region84
        $region83: #{lenet_forward.1} parent=71 // pred_region
          %438 = dma.done [#allocation6], 6912
        $region84: #{lenet_forward.1} parent=71 // pred_fallthru
          _
        %p439 = scmp.lt.s32.totalorder %s29, 1
        %s440 = scalar_select %p439, %s29, 1
        %s441 = smul.addr %s440, 8
        %s442 = scalar_lea.vmem %s0, %s441
        %p443 = pneg %p50
        %p444 = pneg %p47
        %p445 = pneg %p71
        %p446 = pneg %p68
        %p447 = pneg %p92
        %p448 = pneg %p89
        %p449 = pneg %p113
        %p450 = pneg %p110
        %p451 = pneg %p134
        %p452 = pneg %p131
        %p453 = pneg %p155
        %p454 = pneg %p152
        %p455 = pneg %p176
        %p456 = pneg %p173
        %p457 = pneg %p197
        %p458 = pneg %p194
        %p459 = pneg %p218
        %p460 = pneg %p215
        %p461 = pneg %p239
        %p462 = pneg %p236
        %p463 = pneg %p260
        %p464 = pneg %p257
        %p465 = pneg %p281
        %p466 = pneg %p278
        %p467 = pneg %p302
        %p468 = pneg %p299
        %p469 = pneg %p328
        %p470 = pneg %p325
        %s471 = sand.u32 %s315, 1
        %s472 = scalar_lea.sflag [#allocation4], %s471
        %s473 = sand.u32 %s315, 1
        %s474 = scalar_lea.vmem [#allocation8], %s473
        %p475 = scmp.lt.s32.totalorder %s29, 1
        %s476 = scalar_select %p475, %s29, 1
        %s477 = smul.addr %s476, 8
        %s478 = scalar_lea.vmem %s0, %s477
        %v480 = vld [vmem:[%s478] sm:$0x3f]
        %v481 = vpack.c.bf16 %v480, %v480
        %v482 = vld [vmem:[%s478 + $0x1] sm:$0x3f]
        %v483 = vpack.c.bf16 %v482, %v482
        %v484 = vld [vmem:[#allocation2] sm:$0xff]
        %v485 = vld [vmem:[#allocation2 + $0x8] sm:$0xff]
        %v486 = vld [vmem:[#allocation2 + $0x10] sm:$0xf]
        %v487 = vld [vmem:[#allocation2 + $0x14] sm:$0xff]
        %v488 = vld [vmem:[#allocation2 + $0x1c] sm:$0xff]
        %v489 = vld [vmem:[#allocation2 + $0x24] sm:$0xf]
        %v490 = vld [vmem:[#allocation2 + $0x28] sm:$0xff]
        %v491 = vld [vmem:[#allocation2 + $0x30] sm:$0xff]
        %v492 = vld [vmem:[#allocation2 + $0x38] sm:$0xf]
        %v493 = vld [vmem:[#allocation2 + $0x3c] sm:$0xff]
        %v494 = vld [vmem:[#allocation2 + $0x44] sm:$0xff]
        %v495 = vld [vmem:[#allocation2 + $0x4c] sm:$0xf]
        %v496 = vld [vmem:[#allocation2 + $0x50] sm:$0xff]
        %v497 = vld [vmem:[#allocation2 + $0x58] sm:$0xff]
        %v498 = vld [vmem:[#allocation2 + $0x60] sm:$0xf]
        %v499 = vld [vmem:[#allocation2 + $0x64] sm:$0xff]
        %v500 = vld [vmem:[#allocation2 + $0x6c] sm:$0xff]
        %v501 = vld [vmem:[#allocation2 + $0x74] sm:$0xf]
        %v502 = vld [vmem:[#allocation2 + $0x78] sm:$0xff]
        %v503 = vld [vmem:[#allocation2 + $0x80] sm:$0xff]
        %v504 = vld [vmem:[#allocation2 + $0x88] sm:$0xf]
        %v505 = vld [vmem:[#allocation2 + $0x8c] sm:$0xff]
        %v506 = vld [vmem:[#allocation2 + $0x94] sm:$0xff]
        %v507 = vld [vmem:[#allocation2 + $0x9c] sm:$0xf]
        %v508 = vld [vmem:[#allocation2 + $0xa0] sm:$0xff]
        %v509 = vld [vmem:[#allocation2 + $0xa8] sm:$0xff]
        %v510 = vld [vmem:[#allocation2 + $0xb0] sm:$0xf]
        %v511 = vld [vmem:[#allocation2 + $0xb4] sm:$0xff]
        %v512 = vld [vmem:[#allocation2 + $0xbc] sm:$0xff]
        %v513 = vld [vmem:[#allocation2 + $0xc4] sm:$0xf]
        %v514 = vld [vmem:[#allocation2 + $0xc8] sm:$0xff]
        %v515 = vld [vmem:[#allocation2 + $0xd0] sm:$0xff]
        %v516 = vld [vmem:[#allocation2 + $0xd8] sm:$0xf]
        %v517 = vld [vmem:[#allocation2 + $0xdc] sm:$0xff]
        %v518 = vld [vmem:[#allocation2 + $0xe4] sm:$0xff]
        %v519 = vld [vmem:[#allocation2 + $0xec] sm:$0xf]
        %v520 = vld [vmem:[#allocation2 + $0xf0] sm:$0xff]
        %v521 = vld [vmem:[#allocation2 + $0xf8] sm:$0xff]
        %v522 = vld [vmem:[#allocation2 + $0x100] sm:$0xf]
        %v523 = vld [vmem:[#allocation2 + $0x104] sm:$0xff]
        %v524 = vld [vmem:[#allocation2 + $0x10c] sm:$0xff]
        %v525 = vld [vmem:[#allocation2 + $0x114] sm:$0xf]
        %s526 = scalar_lea.vmem [#allocation2], 280
        %v527 = vld [vmem:[%s526] sm:$0xff]
        %v528 = vld [vmem:[%s526 + $0x8] sm:$0xff]
        %v529 = vld [vmem:[%s526 + $0x10] sm:$0xf]
        %v530 = vld [vmem:[%s526 + $0x14] sm:$0xff]
        %v531 = vld [vmem:[%s526 + $0x1c] sm:$0xff]
        %v532 = vld [vmem:[%s526 + $0x24] sm:$0xf]
        %v533 = vld [vmem:[%s526 + $0x28] sm:$0xff]
        %v534 = vld [vmem:[%s526 + $0x30] sm:$0xff]
        %v535 = vld [vmem:[%s526 + $0x38] sm:$0xf]
        %v536 = vld [vmem:[%s526 + $0x3c] sm:$0xff]
        %v537 = vld [vmem:[%s526 + $0x44] sm:$0xff]
        %v538 = vld [vmem:[%s526 + $0x4c] sm:$0xf]
        %v539 = vld [vmem:[%s526 + $0x50] sm:$0xff]
        %v540 = vld [vmem:[%s526 + $0x58] sm:$0xff]
        %v541 = vld [vmem:[%s526 + $0x60] sm:$0xf]
        %v542 = vld [vmem:[%s526 + $0x64] sm:$0xff]
        %v543 = vld [vmem:[%s526 + $0x6c] sm:$0xff]
        %v544 = vld [vmem:[%s526 + $0x74] sm:$0xf]
        %v545 = vld [vmem:[%s526 + $0x78] sm:$0xff]
        %v546 = vld [vmem:[%s526 + $0x80] sm:$0xff]
        %v547 = vld [vmem:[%s526 + $0x88] sm:$0xf]
        %v548 = vld [vmem:[%s526 + $0x8c] sm:$0xff]
        %v549 = vld [vmem:[%s526 + $0x94] sm:$0xff]
        %v550 = vld [vmem:[%s526 + $0x9c] sm:$0xf]
        %v551 = vld [vmem:[%s526 + $0xa0] sm:$0xff]
        %v552 = vld [vmem:[%s526 + $0xa8] sm:$0xff]
        %v553 = vld [vmem:[%s526 + $0xb0] sm:$0xf]
        %v554 = vld [vmem:[%s526 + $0xb4] sm:$0xff]
        %v555 = vld [vmem:[%s526 + $0xbc] sm:$0xff]
        %v556 = vld [vmem:[%s526 + $0xc4] sm:$0xf]
        %v557 = vld [vmem:[%s526 + $0xc8] sm:$0xff]
        %v558 = vld [vmem:[%s526 + $0xd0] sm:$0xff]
        %v559 = vld [vmem:[%s526 + $0xd8] sm:$0xf]
        %v560 = vld [vmem:[%s526 + $0xdc] sm:$0xff]
        %v561 = vld [vmem:[%s526 + $0xe4] sm:$0xff]
        %v562 = vld [vmem:[%s526 + $0xec] sm:$0xf]
        %v563 = vld [vmem:[%s526 + $0xf0] sm:$0xff]
        %v564 = vld [vmem:[%s526 + $0xf8] sm:$0xff]
        %v565 = vld [vmem:[%s526 + $0x100] sm:$0xf]
        %v566 = vld [vmem:[%s526 + $0x104] sm:$0xff]
        %v567 = vld [vmem:[%s526 + $0x10c] sm:$0xff]
        %v568 = vld [vmem:[%s526 + $0x114] sm:$0xf]
        %v611 = vunpack.c.l.b16 %v527
        %v612 = vunpack.c.h.b16 %v527
        %v613 = vunpack.c.l.b16 %v528
        %v614 = vunpack.c.h.b16 %v528
        %v615 = vunpack.c.l.b16 %v529
        %v616 = vunpack.c.l.b16 %v530
        %v617 = vunpack.c.h.b16 %v530
        %v618 = vunpack.c.l.b16 %v531
        %v619 = vunpack.c.h.b16 %v531
        %v620 = vunpack.c.l.b16 %v532
        %v621 = vunpack.c.l.b16 %v533
        %v622 = vunpack.c.h.b16 %v533
        %v623 = vunpack.c.l.b16 %v534
        %v624 = vunpack.c.h.b16 %v534
        %v625 = vunpack.c.l.b16 %v535
        %v626 = vunpack.c.l.b16 %v536
        %v627 = vunpack.c.h.b16 %v536
        %v628 = vunpack.c.l.b16 %v537
        %v629 = vunpack.c.h.b16 %v537
        %v630 = vunpack.c.l.b16 %v538
        %v631 = vunpack.c.l.b16 %v539
        %v632 = vunpack.c.h.b16 %v539
        %v633 = vunpack.c.l.b16 %v540
        %v634 = vunpack.c.h.b16 %v540
        %v635 = vunpack.c.l.b16 %v541
        %v636 = vunpack.c.l.b16 %v542
        %v637 = vunpack.c.h.b16 %v542
        %v638 = vunpack.c.l.b16 %v543
        %v639 = vunpack.c.h.b16 %v543
        %v640 = vunpack.c.l.b16 %v544
        %v641 = vunpack.c.l.b16 %v545
        %v642 = vunpack.c.h.b16 %v545
        %v643 = vunpack.c.l.b16 %v546
        %v644 = vunpack.c.h.b16 %v546
        %v645 = vunpack.c.l.b16 %v547
        %v646 = vunpack.c.l.b16 %v548
        %v647 = vunpack.c.h.b16 %v548
        %v648 = vunpack.c.l.b16 %v549
        %v649 = vunpack.c.h.b16 %v549
        %v650 = vunpack.c.l.b16 %v550
        %v651 = vunpack.c.l.b16 %v551
        %v652 = vunpack.c.h.b16 %v551
        %v653 = vunpack.c.l.b16 %v552
        %v654 = vunpack.c.h.b16 %v552
        %v655 = vunpack.c.l.b16 %v553
        %v656 = vunpack.c.l.b16 %v554
        %v657 = vunpack.c.h.b16 %v554
        %v658 = vunpack.c.l.b16 %v555
        %v659 = vunpack.c.h.b16 %v555
        %v660 = vunpack.c.l.b16 %v556
        %v661 = vunpack.c.l.b16 %v557
        %v662 = vunpack.c.h.b16 %v557
        %v663 = vunpack.c.l.b16 %v558
        %v664 = vunpack.c.h.b16 %v558
        %v665 = vunpack.c.l.b16 %v559
        %v666 = vunpack.c.l.b16 %v560
        %v667 = vunpack.c.h.b16 %v560
        %v668 = vunpack.c.l.b16 %v561
        %v669 = vunpack.c.h.b16 %v561
        %v670 = vunpack.c.l.b16 %v562
        %v671 = vunpack.c.l.b16 %v563
        %v672 = vunpack.c.h.b16 %v563
        %v673 = vunpack.c.l.b16 %v564
        %v674 = vunpack.c.h.b16 %v564
        %v675 = vunpack.c.l.b16 %v565
        %v676 = vunpack.c.l.b16 %v566
        %v677 = vunpack.c.h.b16 %v566
        %v678 = vunpack.c.l.b16 %v567
        %v679 = vunpack.c.h.b16 %v567
        %v680 = vunpack.c.l.b16 %v568
        %v681 = vpack.c.b16 %v616, %v611
        %v682 = vpack.c.b16 %v617, %v612
        %v683 = vpack.c.b16 %v618, %v613
        %v684 = vpack.c.b16 %v619, %v614
        %v685 = vpack.c.b16 %v620, %v615
        %v686 = vpack.c.b16 %v626, %v621
        %v687 = vpack.c.b16 %v627, %v622
        %v688 = vpack.c.b16 %v628, %v623
        %v689 = vpack.c.b16 %v629, %v624
        %v690 = vpack.c.b16 %v630, %v625
        %v691 = vpack.c.b16 %v636, %v631
        %v692 = vpack.c.b16 %v637, %v632
        %v693 = vpack.c.b16 %v638, %v633
        %v694 = vpack.c.b16 %v639, %v634
        %v695 = vpack.c.b16 %v640, %v635
        %v696 = vpack.c.b16 %v646, %v641
        %v697 = vpack.c.b16 %v647, %v642
        %v698 = vpack.c.b16 %v648, %v643
        %v699 = vpack.c.b16 %v649, %v644
        %v700 = vpack.c.b16 %v650, %v645
        %v701 = vpack.c.b16 %v656, %v651
        %v702 = vpack.c.b16 %v657, %v652
        %v703 = vpack.c.b16 %v658, %v653
        %v704 = vpack.c.b16 %v659, %v654
        %v705 = vpack.c.b16 %v660, %v655
        %v706 = vpack.c.b16 %v666, %v661
        %v707 = vpack.c.b16 %v667, %v662
        %v708 = vpack.c.b16 %v668, %v663
        %v709 = vpack.c.b16 %v669, %v664
        %v710 = vpack.c.b16 %v670, %v665
        %v711 = vpack.c.b16 %v676, %v671
        %v712 = vpack.c.b16 %v677, %v672
        %v713 = vpack.c.b16 %v678, %v673
        %v714 = vpack.c.b16 %v679, %v674
        %v715 = vpack.c.b16 %v680, %v675
        %vm751 = vcmask 916480
        %v753 = vsel %vm751, %v483, 0
        %755 = vmatprep.subr.bf16.mxu0 %v682
        %756 = vmatpush1.bf16.msra.mxu0 %v681
        %757 = vmatprep.subr.bf16.mxu0 %v687
        %758 = vmatpush1.bf16.msra.mxu0 %v686
        %759 = vmatprep.subr.bf16.mxu0 %v692
        %760 = vmatpush1.bf16.msra.mxu0 %v691
        %761 = vmatprep.subr.bf16.mxu0 %v697
        %762 = vmatpush1.bf16.msra.mxu0 %v696
        %763 = vmatprep.subr.bf16.mxu0 %v702
        %764 = vmatpush1.bf16.msra.mxu0 %v701
        %765 = vmatprep.subr.bf16.mxu0 %v707
        %766 = vmatpush1.bf16.msra.mxu0 %v706
        %767 = vmatprep.subr.bf16.mxu0 %v712
        %768 = vmatpush1.bf16.msra.mxu0 %v711
        %769 = vmatprep.subr.bf16.mxu0 0
        %770 = vmatpush1.bf16.msra.mxu0 0
        %771 = vmatprep.subr.bf16.mxu0 0
        %772 = vmatpush1.bf16.msra.mxu0 0
        %773 = vmatprep.subr.bf16.mxu0 0
        %774 = vmatpush1.bf16.msra.mxu0 0
        %775 = vmatprep.subr.bf16.mxu0 0
        %776 = vmatpush1.bf16.msra.mxu0 0
        %777 = vmatprep.subr.bf16.mxu0 0
        %778 = vmatpush1.bf16.msra.mxu0 0
        %779 = vmatprep.subr.bf16.mxu0 0
        %780 = vmatpush1.bf16.msra.mxu0 0
        %781 = vmatprep.subr.bf16.mxu0 0
        %782 = vmatpush1.bf16.msra.mxu0 0
        %783 = vmatprep.subr.bf16.mxu0 0
        %784 = vmatpush1.bf16.msra.mxu0 0
        %785 = vmatprep.subr.bf16.mxu0 0
        %786 = vmatpush1.bf16.msra.mxu0 0
        %787 = vmatprep.mubr.bf16.mxu0 0
        %788 = vmatmul.mubr.bf16.gmra.mrb[0].mxu0 %v753
        %v789 = vpop.f32.mrb[0].mxu0
        %v790 = vadd.f32 0.0, %v789
        %v791 = vpop.f32.mrb[0].mxu0
        %v792 = vadd.f32 0.0, %v791
        %v793 = vpop.f32.mrb[0].mxu0
        %v794 = vpop.f32.mrb[0].mxu0
        %795 = vdwg.mxu0
        %796 = vmatprep.subr.bf16.mxu0 %v684
        %797 = vmatpush1.bf16.msra.mxu0 %v683
        %798 = vmatprep.subr.bf16.mxu0 %v689
        %799 = vmatpush1.bf16.msra.mxu0 %v688
        %800 = vmatprep.subr.bf16.mxu0 %v694
        %801 = vmatpush1.bf16.msra.mxu0 %v693
        %802 = vmatprep.subr.bf16.mxu0 %v699
        %803 = vmatpush1.bf16.msra.mxu0 %v698
        %804 = vmatprep.subr.bf16.mxu0 %v704
        %805 = vmatpush1.bf16.msra.mxu0 %v703
        %806 = vmatprep.subr.bf16.mxu0 %v709
        %807 = vmatpush1.bf16.msra.mxu0 %v708
        %808 = vmatprep.subr.bf16.mxu0 %v714
        %809 = vmatpush1.bf16.msra.mxu0 %v713
        %810 = vmatprep.subr.bf16.mxu0 0
        %811 = vmatpush1.bf16.msra.mxu0 0
        %812 = vmatprep.subr.bf16.mxu0 0
        %813 = vmatpush1.bf16.msra.mxu0 0
        %814 = vmatprep.subr.bf16.mxu0 0
        %815 = vmatpush1.bf16.msra.mxu0 0
        %816 = vmatprep.subr.bf16.mxu0 0
        %817 = vmatpush1.bf16.msra.mxu0 0
        %818 = vmatprep.subr.bf16.mxu0 0
        %819 = vmatpush1.bf16.msra.mxu0 0
        %820 = vmatprep.subr.bf16.mxu0 0
        %821 = vmatpush1.bf16.msra.mxu0 0
        %822 = vmatprep.subr.bf16.mxu0 0
        %823 = vmatpush1.bf16.msra.mxu0 0
        %824 = vmatprep.subr.bf16.mxu0 0
        %825 = vmatpush1.bf16.msra.mxu0 0
        %826 = vmatprep.subr.bf16.mxu0 0
        %827 = vmatpush1.bf16.msra.mxu0 0
        %828 = vmatprep.mubr.bf16.mxu0 0
        %829 = vmatmul.mubr.bf16.gmra.mrb[0].mxu0 %v753
        %v830 = vpop.f32.mrb[0].mxu0
        %v831 = vadd.f32 0.0, %v830
        %v832 = vpop.f32.mrb[0].mxu0
        %v833 = vadd.f32 0.0, %v832
        %v834 = vpop.f32.mrb[0].mxu0
        %v835 = vpop.f32.mrb[0].mxu0
        %836 = vdwg.mxu0
        %837 = vmatprep.subr.bf16.mxu0 0
        %838 = vmatpush1.bf16.msra.mxu0 %v685
        %839 = vmatprep.subr.bf16.mxu0 0
        %840 = vmatpush1.bf16.msra.mxu0 %v690
        %841 = vmatprep.subr.bf16.mxu0 0
        %842 = vmatpush1.bf16.msra.mxu0 %v695
        %843 = vmatprep.subr.bf16.mxu0 0
        %844 = vmatpush1.bf16.msra.mxu0 %v700
        %845 = vmatprep.subr.bf16.mxu0 0
        %846 = vmatpush1.bf16.msra.mxu0 %v705
        %847 = vmatprep.subr.bf16.mxu0 0
        %848 = vmatpush1.bf16.msra.mxu0 %v710
        %849 = vmatprep.subr.bf16.mxu0 0
        %850 = vmatpush1.bf16.msra.mxu0 %v715
        %851 = vmatprep.subr.bf16.mxu0 0
        %852 = vmatpush1.bf16.msra.mxu0 0
        %853 = vmatprep.subr.bf16.mxu0 0
        %854 = vmatpush1.bf16.msra.mxu0 0
        %855 = vmatprep.subr.bf16.mxu0 0
        %856 = vmatpush1.bf16.msra.mxu0 0
        %857 = vmatprep.subr.bf16.mxu0 0
        %858 = vmatpush1.bf16.msra.mxu0 0
        %859 = vmatprep.subr.bf16.mxu0 0
        %860 = vmatpush1.bf16.msra.mxu0 0
        %861 = vmatprep.subr.bf16.mxu0 0
        %862 = vmatpush1.bf16.msra.mxu0 0
        %863 = vmatprep.subr.bf16.mxu0 0
        %864 = vmatpush1.bf16.msra.mxu0 0
        %865 = vmatprep.subr.bf16.mxu0 0
        %866 = vmatpush1.bf16.msra.mxu0 0
        %867 = vmatprep.subr.bf16.mxu0 0
        %868 = vmatpush1.bf16.msra.mxu0 0
        %869 = vmatprep.mubr.bf16.mxu0 0
        %870 = vmatmul.mubr.bf16.gmra.mrb[0].mxu0 %v753
        %v871 = vpop.f32.mrb[0].mxu0
        %v872 = vadd.f32 0.0, %v871
        %v873 = vpop.f32.mrb[0].mxu0
        %v874 = vpop.f32.mrb[0].mxu0
        %v875 = vpop.f32.mrb[0].mxu0
        %876 = vdwg.mxu0
        %v919 = vunpack.c.l.b16 %v484
        %v920 = vunpack.c.h.b16 %v484
        %v921 = vunpack.c.l.b16 %v485
        %v922 = vunpack.c.h.b16 %v485
        %v923 = vunpack.c.l.b16 %v486
        %v924 = vunpack.c.l.b16 %v487
        %v925 = vunpack.c.h.b16 %v487
        %v926 = vunpack.c.l.b16 %v488
        %v927 = vunpack.c.h.b16 %v488
        %v928 = vunpack.c.l.b16 %v489
        %v929 = vunpack.c.l.b16 %v490
        %v930 = vunpack.c.h.b16 %v490
        %v931 = vunpack.c.l.b16 %v491
        %v932 = vunpack.c.h.b16 %v491
        %v933 = vunpack.c.l.b16 %v492
        %v934 = vunpack.c.l.b16 %v493
        %v935 = vunpack.c.h.b16 %v493
        %v936 = vunpack.c.l.b16 %v494
        %v937 = vunpack.c.h.b16 %v494
        %v938 = vunpack.c.l.b16 %v495
        %v939 = vunpack.c.l.b16 %v496
        %v940 = vunpack.c.h.b16 %v496
        %v941 = vunpack.c.l.b16 %v497
        %v942 = vunpack.c.h.b16 %v497
        %v943 = vunpack.c.l.b16 %v498
        %v944 = vunpack.c.l.b16 %v499
        %v945 = vunpack.c.h.b16 %v499
        %v946 = vunpack.c.l.b16 %v500
        %v947 = vunpack.c.h.b16 %v500
        %v948 = vunpack.c.l.b16 %v501
        %v949 = vunpack.c.l.b16 %v502
        %v950 = vunpack.c.h.b16 %v502
        %v951 = vunpack.c.l.b16 %v503
        %v952 = vunpack.c.h.b16 %v503
        %v953 = vunpack.c.l.b16 %v504
        %v954 = vunpack.c.l.b16 %v505
        %v955 = vunpack.c.h.b16 %v505
        %v956 = vunpack.c.l.b16 %v506
        %v957 = vunpack.c.h.b16 %v506
        %v958 = vunpack.c.l.b16 %v507
        %v959 = vunpack.c.l.b16 %v508
        %v960 = vunpack.c.h.b16 %v508
        %v961 = vunpack.c.l.b16 %v509
        %v962 = vunpack.c.h.b16 %v509
        %v963 = vunpack.c.l.b16 %v510
        %v964 = vunpack.c.l.b16 %v511
        %v965 = vunpack.c.h.b16 %v511
        %v966 = vunpack.c.l.b16 %v512
        %v967 = vunpack.c.h.b16 %v512
        %v968 = vunpack.c.l.b16 %v513
        %v969 = vunpack.c.l.b16 %v514
        %v970 = vunpack.c.h.b16 %v514
        %v971 = vunpack.c.l.b16 %v515
        %v972 = vunpack.c.h.b16 %v515
        %v973 = vunpack.c.l.b16 %v516
        %v974 = vunpack.c.l.b16 %v517
        %v975 = vunpack.c.h.b16 %v517
        %v976 = vunpack.c.l.b16 %v518
        %v977 = vunpack.c.h.b16 %v518
        %v978 = vunpack.c.l.b16 %v519
        %v979 = vunpack.c.l.b16 %v520
        %v980 = vunpack.c.h.b16 %v520
        %v981 = vunpack.c.l.b16 %v521
        %v982 = vunpack.c.h.b16 %v521
        %v983 = vunpack.c.l.b16 %v522
        %v984 = vunpack.c.l.b16 %v523
        %v985 = vunpack.c.h.b16 %v523
        %v986 = vunpack.c.l.b16 %v524
        %v987 = vunpack.c.h.b16 %v524
        %v988 = vunpack.c.l.b16 %v525
        %v989 = vpack.c.b16 %v924, %v919
        %v990 = vpack.c.b16 %v925, %v920
        %v991 = vpack.c.b16 %v926, %v921
        %v992 = vpack.c.b16 %v927, %v922
        %v993 = vpack.c.b16 %v928, %v923
        %v994 = vpack.c.b16 %v934, %v929
        %v995 = vpack.c.b16 %v935, %v930
        %v996 = vpack.c.b16 %v936, %v931
        %v997 = vpack.c.b16 %v937, %v932
        %v998 = vpack.c.b16 %v938, %v933
        %v999 = vpack.c.b16 %v944, %v939
        %v1000 = vpack.c.b16 %v945, %v940
        %v1001 = vpack.c.b16 %v946, %v941
        %v1002 = vpack.c.b16 %v947, %v942
        %v1003 = vpack.c.b16 %v948, %v943
        %v1004 = vpack.c.b16 %v954, %v949
        %v1005 = vpack.c.b16 %v955, %v950
        %v1006 = vpack.c.b16 %v956, %v951
        %v1007 = vpack.c.b16 %v957, %v952
        %v1008 = vpack.c.b16 %v958, %v953
        %v1009 = vpack.c.b16 %v964, %v959
        %v1010 = vpack.c.b16 %v965, %v960
        %v1011 = vpack.c.b16 %v966, %v961
        %v1012 = vpack.c.b16 %v967, %v962
        %v1013 = vpack.c.b16 %v968, %v963
        %v1014 = vpack.c.b16 %v974, %v969
        %v1015 = vpack.c.b16 %v975, %v970
        %v1016 = vpack.c.b16 %v976, %v971
        %v1017 = vpack.c.b16 %v977, %v972
        %v1018 = vpack.c.b16 %v978, %v973
        %v1019 = vpack.c.b16 %v984, %v979
        %v1020 = vpack.c.b16 %v985, %v980
        %v1021 = vpack.c.b16 %v986, %v981
        %v1022 = vpack.c.b16 %v987, %v982
        %v1023 = vpack.c.b16 %v988, %v983
        %v1060 = vsel %vm751, %v481, 0
        %1062 = vmatprep.subr.bf16.mxu0 %v990
        %1063 = vmatpush1.bf16.msra.mxu0 %v989
        %1064 = vmatprep.subr.bf16.mxu0 %v995
        %1065 = vmatpush1.bf16.msra.mxu0 %v994
        %1066 = vmatprep.subr.bf16.mxu0 %v1000
        %1067 = vmatpush1.bf16.msra.mxu0 %v999
        %1068 = vmatprep.subr.bf16.mxu0 %v1005
        %1069 = vmatpush1.bf16.msra.mxu0 %v1004
        %1070 = vmatprep.subr.bf16.mxu0 %v1010
        %1071 = vmatpush1.bf16.msra.mxu0 %v1009
        %1072 = vmatprep.subr.bf16.mxu0 %v1015
        %1073 = vmatpush1.bf16.msra.mxu0 %v1014
        %1074 = vmatprep.subr.bf16.mxu0 %v1020
        %1075 = vmatpush1.bf16.msra.mxu0 %v1019
        %1076 = vmatprep.subr.bf16.mxu0 0
        %1077 = vmatpush1.bf16.msra.mxu0 0
        %1078 = vmatprep.subr.bf16.mxu0 0
        %1079 = vmatpush1.bf16.msra.mxu0 0
        %1080 = vmatprep.subr.bf16.mxu0 0
        %1081 = vmatpush1.bf16.msra.mxu0 0
        %1082 = vmatprep.subr.bf16.mxu0 0
        %1083 = vmatpush1.bf16.msra.mxu0 0
        %1084 = vmatprep.subr.bf16.mxu0 0
        %1085 = vmatpush1.bf16.msra.mxu0 0
        %1086 = vmatprep.subr.bf16.mxu0 0
        %1087 = vmatpush1.bf16.msra.mxu0 0
        %1088 = vmatprep.subr.bf16.mxu0 0
        %1089 = vmatpush1.bf16.msra.mxu0 0
        %1090 = vmatprep.subr.bf16.mxu0 0
        %1091 = vmatpush1.bf16.msra.mxu0 0
        %1092 = vmatprep.subr.bf16.mxu0 0
        %1093 = vmatpush1.bf16.msra.mxu0 0
        %1094 = vmatprep.mubr.bf16.mxu0 0
        %1095 = vmatmul.mubr.bf16.gmra.mrb[0].mxu0 %v1060
        %v1096 = vpop.f32.mrb[0].mxu0
        %v1097 = vadd.f32 %v790, %v1096
        %v1098 = vpop.f32.mrb[0].mxu0
        %v1099 = vadd.f32 %v792, %v1098
        %v1100 = vpop.f32.mrb[0].mxu0
        %v1101 = vpop.f32.mrb[0].mxu0
        %1102 = vdwg.mxu0
        %1103 = vmatprep.subr.bf16.mxu0 %v992
        %1104 = vmatpush1.bf16.msra.mxu0 %v991
        %1105 = vmatprep.subr.bf16.mxu0 %v997
        %1106 = vmatpush1.bf16.msra.mxu0 %v996
        %1107 = vmatprep.subr.bf16.mxu0 %v1002
        %1108 = vmatpush1.bf16.msra.mxu0 %v1001
        %1109 = vmatprep.subr.bf16.mxu0 %v1007
        %1110 = vmatpush1.bf16.msra.mxu0 %v1006
        %1111 = vmatprep.subr.bf16.mxu0 %v1012
        %1112 = vmatpush1.bf16.msra.mxu0 %v1011
        %1113 = vmatprep.subr.bf16.mxu0 %v1017
        %1114 = vmatpush1.bf16.msra.mxu0 %v1016
        %1115 = vmatprep.subr.bf16.mxu0 %v1022
        %1116 = vmatpush1.bf16.msra.mxu0 %v1021
        %1117 = vmatprep.subr.bf16.mxu0 0
        %1118 = vmatpush1.bf16.msra.mxu0 0
        %1119 = vmatprep.subr.bf16.mxu0 0
        %1120 = vmatpush1.bf16.msra.mxu0 0
        %1121 = vmatprep.subr.bf16.mxu0 0
        %1122 = vmatpush1.bf16.msra.mxu0 0
        %1123 = vmatprep.subr.bf16.mxu0 0
        %1124 = vmatpush1.bf16.msra.mxu0 0
        %1125 = vmatprep.subr.bf16.mxu0 0
        %1126 = vmatpush1.bf16.msra.mxu0 0
        %1127 = vmatprep.subr.bf16.mxu0 0
        %1128 = vmatpush1.bf16.msra.mxu0 0
        %1129 = vmatprep.subr.bf16.mxu0 0
        %1130 = vmatpush1.bf16.msra.mxu0 0
        %1131 = vmatprep.subr.bf16.mxu0 0
        %1132 = vmatpush1.bf16.msra.mxu0 0
        %1133 = vmatprep.subr.bf16.mxu0 0
        %1134 = vmatpush1.bf16.msra.mxu0 0
        %1135 = vmatprep.mubr.bf16.mxu0 0
        %1136 = vmatmul.mubr.bf16.gmra.mrb[0].mxu0 %v1060
        %v1137 = vpop.f32.mrb[0].mxu0
        %v1138 = vadd.f32 %v831, %v1137
        %v1139 = vpop.f32.mrb[0].mxu0
        %v1140 = vadd.f32 %v833, %v1139
        %v1141 = vpop.f32.mrb[0].mxu0
        %v1142 = vpop.f32.mrb[0].mxu0
        %1143 = vdwg.mxu0
        %1144 = vmatprep.subr.bf16.mxu0 0
        %1145 = vmatpush1.bf16.msra.mxu0 %v993
        %1146 = vmatprep.subr.bf16.mxu0 0
        %1147 = vmatpush1.bf16.msra.mxu0 %v998
        %1148 = vmatprep.subr.bf16.mxu0 0
        %1149 = vmatpush1.bf16.msra.mxu0 %v1003
        %1150 = vmatprep.subr.bf16.mxu0 0
        %1151 = vmatpush1.bf16.msra.mxu0 %v1008
        %1152 = vmatprep.subr.bf16.mxu0 0
        %1153 = vmatpush1.bf16.msra.mxu0 %v1013
        %1154 = vmatprep.subr.bf16.mxu0 0
        %1155 = vmatpush1.bf16.msra.mxu0 %v1018
        %1156 = vmatprep.subr.bf16.mxu0 0
        %1157 = vmatpush1.bf16.msra.mxu0 %v1023
        %1158 = vmatprep.subr.bf16.mxu0 0
        %1159 = vmatpush1.bf16.msra.mxu0 0
        %1160 = vmatprep.subr.bf16.mxu0 0
        %1161 = vmatpush1.bf16.msra.mxu0 0
        %1162 = vmatprep.subr.bf16.mxu0 0
        %1163 = vmatpush1.bf16.msra.mxu0 0
        %1164 = vmatprep.subr.bf16.mxu0 0
        %1165 = vmatpush1.bf16.msra.mxu0 0
        %1166 = vmatprep.subr.bf16.mxu0 0
        %1167 = vmatpush1.bf16.msra.mxu0 0
        %1168 = vmatprep.subr.bf16.mxu0 0
        %1169 = vmatpush1.bf16.msra.mxu0 0
        %1170 = vmatprep.subr.bf16.mxu0 0
        %1171 = vmatpush1.bf16.msra.mxu0 0
        %1172 = vmatprep.subr.bf16.mxu0 0
        %1173 = vmatpush1.bf16.msra.mxu0 0
        %1174 = vmatprep.subr.bf16.mxu0 0
        %1175 = vmatpush1.bf16.msra.mxu0 0
        %1176 = vmatprep.mubr.bf16.mxu0 0
        %1177 = vmatmul.mubr.bf16.gmra.mrb[0].mxu0 %v1060
        %v1178 = vpop.f32.mrb[0].mxu0
        %v1179 = vadd.f32 %v872, %v1178
        %v1180 = vpop.f32.mrb[0].mxu0
        %v1181 = vpop.f32.mrb[0].mxu0
        %v1182 = vpop.f32.mrb[0].mxu0
        %1183 = vdwg.mxu0
        %v1184 = vld [vmem:[%s2] sm:$0x1f]
        %v1186 = vlaneseq
        %v1187 = vshrl.u32 %v1186, 7
        %v1188 = vsub.s32 0, %v1187
        %v1189 = vrot.slane %v1184, %v1188
        %v1190 = vlaneseq
        %v1191 = vshrl.u32 %v1190, 7
        %v1192 = vsub.s32 1, %v1191
        %v1193 = vrot.slane %v1184, %v1192
        %v1194 = vlaneseq
        %v1195 = vshrl.u32 %v1194, 7
        %v1196 = vsub.s32 2, %v1195
        %v1197 = vrot.slane %v1184, %v1196
        %v1198 = vlaneseq
        %v1199 = vshrl.u32 %v1198, 7
        %v1200 = vsub.s32 3, %v1199
        %v1201 = vrot.slane %v1184, %v1200
        %v1202 = vlaneseq
        %v1203 = vshrl.u32 %v1202, 7
        %v1204 = vsub.s32 4, %v1203
        %v1205 = vrot.slane %v1184, %v1204
        %v1211 = vadd.f32 %v1097, %v1189
        %v1212 = vadd.f32 %v1099, %v1193
        %v1213 = vadd.f32 %v1138, %v1197
        %v1214 = vadd.f32 %v1140, %v1201
        %v1215 = vadd.f32 %v1179, %v1205
        %v1216 = vmax.f32 %v1211, 0.0
        %v1217 = vmax.f32 %v1212, 0.0
        %v1218 = vmax.f32 %v1213, 0.0
        %v1219 = vmax.f32 %v1214, 0.0
        %v1220 = vmax.f32 %v1215, 0.0
        %1224 = vrot.lane.b32.xlu0 %v1218, 96
        %v1225 = vpop.permute.xlu0 %1224
        %1226 = vrot.lane.b32.xlu0 %v1219, 96
        %v1227 = vpop.permute.xlu0 %1226
        %1228 = vrot.lane.b32.xlu0 %v1220, 96
        %v1229 = vpop.permute.xlu0 %1228
        %vm1230 = vcmask 785408
        %v1231 = vsel %vm1230, %v1225, %v1227
        %v1232 = vsel %vm1230, %v1227, %v1229
        %v1236 = vmax.f32 %v1216, %v1231
        %v1237 = vmax.f32 %v1217, %v1232
        %v1238 = vmax.f32 %v1218, %v1229
        %v1239 = vpack.c.bf16 %v1236, %v1236
        %v1240 = vpack.c.bf16 %v1237, %v1237
        %v1241 = vpack.c.bf16 %v1238, %v1238
        %v1242 = vld [vmem:[#allocation5] sm:$0xff]
        %v1243 = vld [vmem:[#allocation5 + $0x8] sm:$0xf]
        %v1244 = vld [vmem:[#allocation5 + $0xc] sm:$0xff]
        %v1245 = vld [vmem:[#allocation5 + $0x14] sm:$0xf]
        %v1246 = vld [vmem:[#allocation5 + $0x18] sm:$0xff]
        %v1247 = vld [vmem:[#allocation5 + $0x20] sm:$0xf]
        %v1248 = vld [vmem:[#allocation5 + $0x24] sm:$0xff]
        %v1249 = vld [vmem:[#allocation5 + $0x2c] sm:$0xf]
        %v1250 = vld [vmem:[#allocation5 + $0x30] sm:$0xff]
        %v1251 = vld [vmem:[#allocation5 + $0x38] sm:$0xf]
        %v1252 = vld [vmem:[#allocation5 + $0x3c] sm:$0xff]
        %v1253 = vld [vmem:[#allocation5 + $0x44] sm:$0xf]
        %v1254 = vld [vmem:[#allocation5 + $0x48] sm:$0xff]
        %v1255 = vld [vmem:[#allocation5 + $0x50] sm:$0xf]
        %v1256 = vld [vmem:[#allocation5 + $0x54] sm:$0xff]
        %v1257 = vld [vmem:[#allocation5 + $0x5c] sm:$0xf]
        %v1258 = vld [vmem:[#allocation5 + $0x60] sm:$0xff]
        %v1259 = vld [vmem:[#allocation5 + $0x68] sm:$0xf]
        %v1260 = vld [vmem:[#allocation5 + $0x6c] sm:$0xff]
        %v1261 = vld [vmem:[#allocation5 + $0x74] sm:$0xf]
        %v1262 = vld [vmem:[#allocation5 + $0x78] sm:$0xff]
        %v1263 = vld [vmem:[#allocation5 + $0x80] sm:$0xf]
        %v1264 = vld [vmem:[#allocation5 + $0x84] sm:$0xff]
        %v1265 = vld [vmem:[#allocation5 + $0x8c] sm:$0xf]
        %v1266 = vld [vmem:[#allocation5 + $0x90] sm:$0xff]
        %v1267 = vld [vmem:[#allocation5 + $0x98] sm:$0xf]
        %v1268 = vld [vmem:[#allocation5 + $0x9c] sm:$0xff]
        %v1269 = vld [vmem:[#allocation5 + $0xa4] sm:$0xf]
        %v1270 = vld [vmem:[#allocation5 + $0xa8] sm:$0xff]
        %v1271 = vld [vmem:[#allocation5 + $0xb0] sm:$0xf]
        %v1272 = vld [vmem:[#allocation5 + $0xb4] sm:$0xff]
        %v1273 = vld [vmem:[#allocation5 + $0xbc] sm:$0xf]
        %v1274 = vld [vmem:[#allocation5 + $0xc0] sm:$0xff]
        %v1275 = vld [vmem:[#allocation5 + $0xc8] sm:$0xf]
        %v1276 = vld [vmem:[#allocation5 + $0xcc] sm:$0xff]
        %v1277 = vld [vmem:[#allocation5 + $0xd4] sm:$0xf]
        %v1278 = vld [vmem:[#allocation5 + $0xd8] sm:$0xff]
        %v1279 = vld [vmem:[#allocation5 + $0xe0] sm:$0xf]
        %v1280 = vld [vmem:[#allocation5 + $0xe4] sm:$0xff]
        %v1281 = vld [vmem:[#allocation5 + $0xec] sm:$0xf]
        %v1282 = vld [vmem:[#allocation5 + $0xf0] sm:$0xff]
        %v1283 = vld [vmem:[#allocation5 + $0xf8] sm:$0xf]
        %v1284 = vld [vmem:[#allocation5 + $0xfc] sm:$0xff]
        %v1285 = vld [vmem:[#allocation5 + $0x104] sm:$0xf]
        %v1286 = vld [vmem:[#allocation5 + $0x108] sm:$0xff]
        %v1287 = vld [vmem:[#allocation5 + $0x110] sm:$0xf]
        %v1288 = vld [vmem:[#allocation5 + $0x114] sm:$0xff]
        %v1289 = vld [vmem:[#allocation5 + $0x11c] sm:$0xf]
        %v1290 = vld [vmem:[#allocation5 + $0x120] sm:$0xff]
        %v1291 = vld [vmem:[#allocation5 + $0x128] sm:$0xf]
        %v1292 = vld [vmem:[#allocation5 + $0x12c] sm:$0xff]
        %v1293 = vld [vmem:[#allocation5 + $0x134] sm:$0xf]
        %v1294 = vld [vmem:[#allocation5 + $0x138] sm:$0xff]
        %v1295 = vld [vmem:[#allocation5 + $0x140] sm:$0xf]
        %v1296 = vld [vmem:[#allocation5 + $0x144] sm:$0xff]
        %v1297 = vld [vmem:[#allocation5 + $0x14c] sm:$0xf]
        %v1298 = vld [vmem:[#allocation5 + $0x150] sm:$0xff]
        %v1299 = vld [vmem:[#allocation5 + $0x158] sm:$0xf]
        %v1300 = vld [vmem:[#allocation5 + $0x15c] sm:$0xff]
        %v1301 = vld [vmem:[#allocation5 + $0x164] sm:$0xf]
        %v1302 = vld [vmem:[#allocation5 + $0x168] sm:$0xff]
        %v1303 = vld [vmem:[#allocation5 + $0x170] sm:$0xf]
        %v1304 = vld [vmem:[#allocation5 + $0x174] sm:$0xff]
        %v1305 = vld [vmem:[#allocation5 + $0x17c] sm:$0xf]
        %v1306 = vld [vmem:[#allocation5 + $0x180] sm:$0xff]
        %v1307 = vld [vmem:[#allocation5 + $0x188] sm:$0xf]
        %v1308 = vld [vmem:[#allocation5 + $0x18c] sm:$0xff]
        %v1309 = vld [vmem:[#allocation5 + $0x194] sm:$0xf]
        %v1310 = vld [vmem:[#allocation5 + $0x198] sm:$0xff]
        %v1311 = vld [vmem:[#allocation5 + $0x1a0] sm:$0xf]
        %v1312 = vld [vmem:[#allocation5 + $0x1a4] sm:$0xff]
        %v1313 = vld [vmem:[#allocation5 + $0x1ac] sm:$0xf]
        %v1386 = vunpack.c.l.b16 %v1242
        %v1387 = vunpack.c.h.b16 %v1242
        %v1388 = vunpack.c.l.b16 %v1243
        %v1389 = vunpack.c.l.b16 %v1244
        %v1390 = vunpack.c.h.b16 %v1244
        %v1391 = vunpack.c.l.b16 %v1245
        %v1392 = vunpack.c.l.b16 %v1246
        %v1393 = vunpack.c.h.b16 %v1246
        %v1394 = vunpack.c.l.b16 %v1247
        %v1395 = vunpack.c.l.b16 %v1248
        %v1396 = vunpack.c.h.b16 %v1248
        %v1397 = vunpack.c.l.b16 %v1249
        %v1398 = vunpack.c.l.b16 %v1250
        %v1399 = vunpack.c.h.b16 %v1250
        %v1400 = vunpack.c.l.b16 %v1251
        %v1401 = vunpack.c.l.b16 %v1252
        %v1402 = vunpack.c.h.b16 %v1252
        %v1403 = vunpack.c.l.b16 %v1253
        %v1404 = vunpack.c.l.b16 %v1254
        %v1405 = vunpack.c.h.b16 %v1254
        %v1406 = vunpack.c.l.b16 %v1255
        %v1407 = vunpack.c.l.b16 %v1256
        %v1408 = vunpack.c.h.b16 %v1256
        %v1409 = vunpack.c.l.b16 %v1257
        %v1410 = vunpack.c.l.b16 %v1258
        %v1411 = vunpack.c.h.b16 %v1258
        %v1412 = vunpack.c.l.b16 %v1259
        %v1413 = vunpack.c.l.b16 %v1260
        %v1414 = vunpack.c.h.b16 %v1260
        %v1415 = vunpack.c.l.b16 %v1261
        %v1416 = vunpack.c.l.b16 %v1262
        %v1417 = vunpack.c.h.b16 %v1262
        %v1418 = vunpack.c.l.b16 %v1263
        %v1419 = vunpack.c.l.b16 %v1264
        %v1420 = vunpack.c.h.b16 %v1264
        %v1421 = vunpack.c.l.b16 %v1265
        %v1422 = vunpack.c.l.b16 %v1266
        %v1423 = vunpack.c.h.b16 %v1266
        %v1424 = vunpack.c.l.b16 %v1267
        %v1425 = vunpack.c.l.b16 %v1268
        %v1426 = vunpack.c.h.b16 %v1268
        %v1427 = vunpack.c.l.b16 %v1269
        %v1428 = vunpack.c.l.b16 %v1270
        %v1429 = vunpack.c.h.b16 %v1270
        %v1430 = vunpack.c.l.b16 %v1271
        %v1431 = vunpack.c.l.b16 %v1272
        %v1432 = vunpack.c.h.b16 %v1272
        %v1433 = vunpack.c.l.b16 %v1273
        %v1434 = vunpack.c.l.b16 %v1274
        %v1435 = vunpack.c.h.b16 %v1274
        %v1436 = vunpack.c.l.b16 %v1275
        %v1437 = vunpack.c.l.b16 %v1276
        %v1438 = vunpack.c.h.b16 %v1276
        %v1439 = vunpack.c.l.b16 %v1277
        %v1440 = vunpack.c.l.b16 %v1278
        %v1441 = vunpack.c.h.b16 %v1278
        %v1442 = vunpack.c.l.b16 %v1279
        %v1443 = vunpack.c.l.b16 %v1280
        %v1444 = vunpack.c.h.b16 %v1280
        %v1445 = vunpack.c.l.b16 %v1281
        %v1446 = vunpack.c.l.b16 %v1282
        %v1447 = vunpack.c.h.b16 %v1282
        %v1448 = vunpack.c.l.b16 %v1283
        %v1449 = vunpack.c.l.b16 %v1284
        %v1450 = vunpack.c.h.b16 %v1284
        %v1451 = vunpack.c.l.b16 %v1285
        %v1452 = vunpack.c.l.b16 %v1286
        %v1453 = vunpack.c.h.b16 %v1286
        %v1454 = vunpack.c.l.b16 %v1287
        %v1455 = vunpack.c.l.b16 %v1288
        %v1456 = vunpack.c.h.b16 %v1288
        %v1457 = vunpack.c.l.b16 %v1289
        %v1458 = vunpack.c.l.b16 %v1290
        %v1459 = vunpack.c.h.b16 %v1290
        %v1460 = vunpack.c.l.b16 %v1291
        %v1461 = vunpack.c.l.b16 %v1292
        %v1462 = vunpack.c.h.b16 %v1292
        %v1463 = vunpack.c.l.b16 %v1293
        %v1464 = vunpack.c.l.b16 %v1294
        %v1465 = vunpack.c.h.b16 %v1294
        %v1466 = vunpack.c.l.b16 %v1295
        %v1467 = vunpack.c.l.b16 %v1296
        %v1468 = vunpack.c.h.b16 %v1296
        %v1469 = vunpack.c.l.b16 %v1297
        %v1470 = vunpack.c.l.b16 %v1298
        %v1471 = vunpack.c.h.b16 %v1298
        %v1472 = vunpack.c.l.b16 %v1299
        %v1473 = vunpack.c.l.b16 %v1300
        %v1474 = vunpack.c.h.b16 %v1300
        %v1475 = vunpack.c.l.b16 %v1301
        %v1476 = vunpack.c.l.b16 %v1302
        %v1477 = vunpack.c.h.b16 %v1302
        %v1478 = vunpack.c.l.b16 %v1303
        %v1479 = vunpack.c.l.b16 %v1304
        %v1480 = vunpack.c.h.b16 %v1304
        %v1481 = vunpack.c.l.b16 %v1305
        %v1482 = vunpack.c.l.b16 %v1306
        %v1483 = vunpack.c.h.b16 %v1306
        %v1484 = vunpack.c.l.b16 %v1307
        %v1485 = vunpack.c.l.b16 %v1308
        %v1486 = vunpack.c.h.b16 %v1308
        %v1487 = vunpack.c.l.b16 %v1309
        %v1488 = vunpack.c.l.b16 %v1310
        %v1489 = vunpack.c.h.b16 %v1310
        %v1490 = vunpack.c.l.b16 %v1311
        %v1491 = vunpack.c.l.b16 %v1312
        %v1492 = vunpack.c.h.b16 %v1312
        %v1493 = vunpack.c.l.b16 %v1313
        %v1494 = vpack.c.b16 %v1389, %v1386
        %v1495 = vpack.c.b16 %v1390, %v1387
        %v1496 = vpack.c.b16 %v1391, %v1388
        %v1497 = vpack.c.b16 %v1395, %v1392
        %v1498 = vpack.c.b16 %v1396, %v1393
        %v1499 = vpack.c.b16 %v1397, %v1394
        %v1500 = vpack.c.b16 %v1401, %v1398
        %v1501 = vpack.c.b16 %v1402, %v1399
        %v1502 = vpack.c.b16 %v1403, %v1400
        %v1503 = vpack.c.b16 %v1407, %v1404
        %v1504 = vpack.c.b16 %v1408, %v1405
        %v1505 = vpack.c.b16 %v1409, %v1406
        %v1506 = vpack.c.b16 %v1413, %v1410
        %v1507 = vpack.c.b16 %v1414, %v1411
        %v1508 = vpack.c.b16 %v1415, %v1412
        %v1509 = vpack.c.b16 %v1419, %v1416
        %v1510 = vpack.c.b16 %v1420, %v1417
        %v1511 = vpack.c.b16 %v1421, %v1418
        %v1512 = vpack.c.b16 %v1425, %v1422
        %v1513 = vpack.c.b16 %v1426, %v1423
        %v1514 = vpack.c.b16 %v1427, %v1424
        %v1515 = vpack.c.b16 %v1431, %v1428
        %v1516 = vpack.c.b16 %v1432, %v1429
        %v1517 = vpack.c.b16 %v1433, %v1430
        %v1518 = vpack.c.b16 %v1437, %v1434
        %v1519 = vpack.c.b16 %v1438, %v1435
        %v1520 = vpack.c.b16 %v1439, %v1436
        %v1521 = vpack.c.b16 %v1443, %v1440
        %v1522 = vpack.c.b16 %v1444, %v1441
        %v1523 = vpack.c.b16 %v1445, %v1442
        %v1524 = vpack.c.b16 %v1449, %v1446
        %v1525 = vpack.c.b16 %v1450, %v1447
        %v1526 = vpack.c.b16 %v1451, %v1448
        %v1527 = vpack.c.b16 %v1455, %v1452
        %v1528 = vpack.c.b16 %v1456, %v1453
        %v1529 = vpack.c.b16 %v1457, %v1454
        %v1530 = vpack.c.b16 %v1461, %v1458
        %v1531 = vpack.c.b16 %v1462, %v1459
        %v1532 = vpack.c.b16 %v1463, %v1460
        %v1533 = vpack.c.b16 %v1467, %v1464
        %v1534 = vpack.c.b16 %v1468, %v1465
        %v1535 = vpack.c.b16 %v1469, %v1466
        %v1536 = vpack.c.b16 %v1473, %v1470
        %v1537 = vpack.c.b16 %v1474, %v1471
        %v1538 = vpack.c.b16 %v1475, %v1472
        %v1539 = vpack.c.b16 %v1479, %v1476
        %v1540 = vpack.c.b16 %v1480, %v1477
        %v1541 = vpack.c.b16 %v1481, %v1478
        %v1542 = vpack.c.b16 %v1485, %v1482
        %v1543 = vpack.c.b16 %v1486, %v1483
        %v1544 = vpack.c.b16 %v1487, %v1484
        %v1545 = vpack.c.b16 %v1491, %v1488
        %v1546 = vpack.c.b16 %v1492, %v1489
        %v1547 = vpack.c.b16 %v1493, %v1490
        %vm1602 = vcmask 261120
        %v1604 = vsel %vm1602, %v1241, 0
        %1606 = vmatprep.subr.bf16.mxu0 %v1495
        %1607 = vmatpush1.bf16.msra.mxu0 %v1494
        %1608 = vmatprep.subr.bf16.mxu0 %v1498
        %1609 = vmatpush1.bf16.msra.mxu0 %v1497
        %1610 = vmatprep.subr.bf16.mxu0 %v1501
        %1611 = vmatpush1.bf16.msra.mxu0 %v1500
        %1612 = vmatprep.subr.bf16.mxu0 %v1504
        %1613 = vmatpush1.bf16.msra.mxu0 %v1503
        %1614 = vmatprep.subr.bf16.mxu0 %v1507
        %1615 = vmatpush1.bf16.msra.mxu0 %v1506
        %1616 = vmatprep.subr.bf16.mxu0 %v1510
        %1617 = vmatpush1.bf16.msra.mxu0 %v1509
        %1618 = vmatprep.subr.bf16.mxu0 %v1513
        %1619 = vmatpush1.bf16.msra.mxu0 %v1512
        %1620 = vmatprep.subr.bf16.mxu0 %v1516
        %1621 = vmatpush1.bf16.msra.mxu0 %v1515
        %1622 = vmatprep.subr.bf16.mxu0 %v1519
        %1623 = vmatpush1.bf16.msra.mxu0 %v1518
        %1624 = vmatprep.subr.bf16.mxu0 %v1522
        %1625 = vmatpush1.bf16.msra.mxu0 %v1521
        %1626 = vmatprep.subr.bf16.mxu0 %v1525
        %1627 = vmatpush1.bf16.msra.mxu0 %v1524
        %1628 = vmatprep.subr.bf16.mxu0 %v1528
        %1629 = vmatpush1.bf16.msra.mxu0 %v1527
        %1630 = vmatprep.subr.bf16.mxu0 %v1531
        %1631 = vmatpush1.bf16.msra.mxu0 %v1530
        %1632 = vmatprep.subr.bf16.mxu0 %v1534
        %1633 = vmatpush1.bf16.msra.mxu0 %v1533
        %1634 = vmatprep.subr.bf16.mxu0 %v1537
        %1635 = vmatpush1.bf16.msra.mxu0 %v1536
        %1636 = vmatprep.subr.bf16.mxu0 %v1540
        %1637 = vmatpush1.bf16.msra.mxu0 %v1539
        %1638 = vmatprep.mubr.bf16.mxu0 %v1240
        %1639 = vmatmul.mubr.bf16.gmra.mrb[0].mxu0 %v1239
        %v1640 = vpop.f32.mrb[0].mxu0
        %v1641 = vadd.f32 0.0, %v1640
        %v1642 = vpop.f32.mrb[0].mxu0
        %v1643 = vadd.f32 0.0, %v1642
        %v1644 = vpop.f32.mrb[0].mxu0
        %v1645 = vpop.f32.mrb[0].mxu0
        %1646 = vdwg.mxu0
        %1647 = vmatprep.subr.bf16.mxu0 %v1543
        %1648 = vmatpush1.bf16.msra.mxu0 %v1542
        %1649 = vmatprep.subr.bf16.mxu0 %v1546
        %1650 = vmatpush1.bf16.msra.mxu0 %v1545
        %1651 = vmatprep.subr.bf16.mxu0 0
        %1652 = vmatpush1.bf16.msra.mxu0 0
        %1653 = vmatprep.subr.bf16.mxu0 0
        %1654 = vmatpush1.bf16.msra.mxu0 0
        %1655 = vmatprep.subr.bf16.mxu0 0
        %1656 = vmatpush1.bf16.msra.mxu0 0
        %1657 = vmatprep.subr.bf16.mxu0 0
        %1658 = vmatpush1.bf16.msra.mxu0 0
        %1659 = vmatprep.subr.bf16.mxu0 0
        %1660 = vmatpush1.bf16.msra.mxu0 0
        %1661 = vmatprep.subr.bf16.mxu0 0
        %1662 = vmatpush1.bf16.msra.mxu0 0
        %1663 = vmatprep.subr.bf16.mxu0 0
        %1664 = vmatpush1.bf16.msra.mxu0 0
        %1665 = vmatprep.subr.bf16.mxu0 0
        %1666 = vmatpush1.bf16.msra.mxu0 0
        %1667 = vmatprep.subr.bf16.mxu0 0
        %1668 = vmatpush1.bf16.msra.mxu0 0
        %1669 = vmatprep.subr.bf16.mxu0 0
        %1670 = vmatpush1.bf16.msra.mxu0 0
        %1671 = vmatprep.subr.bf16.mxu0 0
        %1672 = vmatpush1.bf16.msra.mxu0 0
        %1673 = vmatprep.subr.bf16.mxu0 0
        %1674 = vmatpush1.bf16.msra.mxu0 0
        %1675 = vmatprep.subr.bf16.mxu0 0
        %1676 = vmatpush1.bf16.msra.mxu0 0
        %1677 = vmatprep.subr.bf16.mxu0 0
        %1678 = vmatpush1.bf16.msra.mxu0 0
        %1679 = vmatprep.mubr.bf16.mxu0 0
        %1680 = vmatmul.mubr.bf16.gmra.mrb[0].mxu0 %v1604
        %v1681 = vpop.f32.mrb[0].mxu0
        %v1682 = vadd.f32 %v1641, %v1681
        %v1683 = vpop.f32.mrb[0].mxu0
        %v1684 = vadd.f32 %v1643, %v1683
        %v1685 = vpop.f32.mrb[0].mxu0
        %v1686 = vpop.f32.mrb[0].mxu0
        %1687 = vdwg.mxu0
        %1688 = vmatprep.subr.bf16.mxu0 0
        %1689 = vmatpush1.bf16.msra.mxu0 %v1496
        %1690 = vmatprep.subr.bf16.mxu0 0
        %1691 = vmatpush1.bf16.msra.mxu0 %v1499
        %1692 = vmatprep.subr.bf16.mxu0 0
        %1693 = vmatpush1.bf16.msra.mxu0 %v1502
        %1694 = vmatprep.subr.bf16.mxu0 0
        %1695 = vmatpush1.bf16.msra.mxu0 %v1505
        %1696 = vmatprep.subr.bf16.mxu0 0
        %1697 = vmatpush1.bf16.msra.mxu0 %v1508
        %1698 = vmatprep.subr.bf16.mxu0 0
        %1699 = vmatpush1.bf16.msra.mxu0 %v1511
        %1700 = vmatprep.subr.bf16.mxu0 0
        %1701 = vmatpush1.bf16.msra.mxu0 %v1514
        %1702 = vmatprep.subr.bf16.mxu0 0
        %1703 = vmatpush1.bf16.msra.mxu0 %v1517
        %1704 = vmatprep.subr.bf16.mxu0 0
        %1705 = vmatpush1.bf16.msra.mxu0 %v1520
        %1706 = vmatprep.subr.bf16.mxu0 0
        %1707 = vmatpush1.bf16.msra.mxu0 %v1523
        %1708 = vmatprep.subr.bf16.mxu0 0
        %1709 = vmatpush1.bf16.msra.mxu0 %v1526
        %1710 = vmatprep.subr.bf16.mxu0 0
        %1711 = vmatpush1.bf16.msra.mxu0 %v1529
        %1712 = vmatprep.subr.bf16.mxu0 0
        %1713 = vmatpush1.bf16.msra.mxu0 %v1532
        %1714 = vmatprep.subr.bf16.mxu0 0
        %1715 = vmatpush1.bf16.msra.mxu0 %v1535
        %1716 = vmatprep.subr.bf16.mxu0 0
        %1717 = vmatpush1.bf16.msra.mxu0 %v1538
        %1718 = vmatprep.subr.bf16.mxu0 0
        %1719 = vmatpush1.bf16.msra.mxu0 %v1541
        %1720 = vmatprep.mubr.bf16.mxu0 %v1240
        %1721 = vmatmul.mubr.bf16.gmra.mrb[0].mxu0 %v1239
        %v1722 = vpop.f32.mrb[0].mxu0
        %v1723 = vadd.f32 0.0, %v1722
        %v1724 = vpop.f32.mrb[0].mxu0
        %v1725 = vpop.f32.mrb[0].mxu0
        %v1726 = vpop.f32.mrb[0].mxu0
        %1727 = vdwg.mxu0
        %1728 = vmatprep.subr.bf16.mxu0 0
        %1729 = vmatpush1.bf16.msra.mxu0 %v1544
        %1730 = vmatprep.subr.bf16.mxu0 0
        %1731 = vmatpush1.bf16.msra.mxu0 %v1547
        %1732 = vmatprep.subr.bf16.mxu0 0
        %1733 = vmatpush1.bf16.msra.mxu0 0
        %1734 = vmatprep.subr.bf16.mxu0 0
        %1735 = vmatpush1.bf16.msra.mxu0 0
        %1736 = vmatprep.subr.bf16.mxu0 0
        %1737 = vmatpush1.bf16.msra.mxu0 0
        %1738 = vmatprep.subr.bf16.mxu0 0
        %1739 = vmatpush1.bf16.msra.mxu0 0
        %1740 = vmatprep.subr.bf16.mxu0 0
        %1741 = vmatpush1.bf16.msra.mxu0 0
        %1742 = vmatprep.subr.bf16.mxu0 0
        %1743 = vmatpush1.bf16.msra.mxu0 0
        %1744 = vmatprep.subr.bf16.mxu0 0
        %1745 = vmatpush1.bf16.msra.mxu0 0
        %1746 = vmatprep.subr.bf16.mxu0 0
        %1747 = vmatpush1.bf16.msra.mxu0 0
        %1748 = vmatprep.subr.bf16.mxu0 0
        %1749 = vmatpush1.bf16.msra.mxu0 0
        %1750 = vmatprep.subr.bf16.mxu0 0
        %1751 = vmatpush1.bf16.msra.mxu0 0
        %1752 = vmatprep.subr.bf16.mxu0 0
        %1753 = vmatpush1.bf16.msra.mxu0 0
        %1754 = vmatprep.subr.bf16.mxu0 0
        %1755 = vmatpush1.bf16.msra.mxu0 0
        %1756 = vmatprep.subr.bf16.mxu0 0
        %1757 = vmatpush1.bf16.msra.mxu0 0
        %1758 = vmatprep.subr.bf16.mxu0 0
        %1759 = vmatpush1.bf16.msra.mxu0 0
        %1760 = vmatprep.mubr.bf16.mxu0 0
        %1761 = vmatmul.mubr.bf16.gmra.mrb[0].mxu0 %v1604
        %v1762 = vpop.f32.mrb[0].mxu0
        %v1763 = vadd.f32 %v1723, %v1762
        %v1764 = vpop.f32.mrb[0].mxu0
        %v1765 = vpop.f32.mrb[0].mxu0
        %v1766 = vpop.f32.mrb[0].mxu0
        %1767 = vdwg.mxu0
        %1770 = vrot.lane.b32.xlu0 %v1684, 112
        %v1771 = vpop.permute.xlu0 %1770
        %1772 = vrot.lane.b32.xlu0 %v1763, 112
        %v1773 = vpop.permute.xlu0 %1772
        %v1774 = vsel %vm751, %v1771, %v1773
        %v1777 = vmax.f32 %v1682, %v1774
        %v1778 = vmax.f32 %v1684, %v1773
        %v1779 = vpack.c.bf16 %v1777, %v1777
        %v1780 = vpack.c.bf16 %v1778, %v1778
        %v1781 = vld [vmem:[#allocation7] sm:$0xff]
        %v1782 = vld [vmem:[#allocation7 + $0x8] sm:$0xff]
        %v1783 = vld [vmem:[#allocation7 + $0x10] sm:$0xff]
        %v1784 = vld [vmem:[#allocation7 + $0x18] sm:$0xff]
        %v1785 = vld [vmem:[#allocation7 + $0x20] sm:$0xff]
        %v1786 = vld [vmem:[#allocation7 + $0x28] sm:$0xff]
        %v1787 = vld [vmem:[#allocation7 + $0x30] sm:$0xff]
        %v1788 = vld [vmem:[#allocation7 + $0x38] sm:$0xff]
        %v1789 = vld [vmem:[#allocation7 + $0x40] sm:$0xff]
        %v1790 = vld [vmem:[#allocation7 + $0x48] sm:$0xff]
        %v1791 = vld [vmem:[#allocation7 + $0x50] sm:$0xff]
        %v1792 = vld [vmem:[#allocation7 + $0x58] sm:$0xff]
        %v1793 = vld [vmem:[#allocation7 + $0x60] sm:$0xff]
        %v1794 = vld [vmem:[#allocation7 + $0x68] sm:$0xff]
        %v1795 = vld [vmem:[#allocation7 + $0x70] sm:$0xff]
        %v1796 = vld [vmem:[#allocation7 + $0x78] sm:$0xff]
        %v1797 = vld [vmem:[#allocation7 + $0x80] sm:$0xff]
        %v1798 = vld [vmem:[#allocation7 + $0x88] sm:$0xff]
        %s1799 = scalar_lea.vmem [#allocation7], 144
        %v1800 = vld [vmem:[%s1799] sm:$0xff]
        %v1801 = vld [vmem:[%s1799 + $0x8] sm:$0xff]
        %v1802 = vld [vmem:[%s1799 + $0x10] sm:$0xff]
        %v1803 = vld [vmem:[%s1799 + $0x18] sm:$0xff]
        %v1804 = vld [vmem:[%s1799 + $0x20] sm:$0xff]
        %v1805 = vld [vmem:[%s1799 + $0x28] sm:$0xff]
        %v1806 = vld [vmem:[%s1799 + $0x30] sm:$0xff]
        %v1807 = vld [vmem:[%s1799 + $0x38] sm:$0xff]
        %v1808 = vld [vmem:[%s1799 + $0x40] sm:$0xff]
        %v1809 = vld [vmem:[%s1799 + $0x48] sm:$0xff]
        %v1810 = vld [vmem:[%s1799 + $0x50] sm:$0xff]
        %v1811 = vld [vmem:[%s1799 + $0x58] sm:$0xff]
        %v1812 = vld [vmem:[%s1799 + $0x60] sm:$0xff]
        %v1813 = vld [vmem:[%s1799 + $0x68] sm:$0xff]
        %v1814 = vld [vmem:[%s1799 + $0x70] sm:$0xff]
        %v1815 = vld [vmem:[%s1799 + $0x78] sm:$0xff]
        %v1816 = vld [vmem:[%s1799 + $0x80] sm:$0xff]
        %v1817 = vld [vmem:[%s1799 + $0x88] sm:$0xff]
        %v1819 = vshrl.u32 %v1779, 16
        %v1821 = vshll.u32 %v1779, 16
        %v1823 = vrot.slane %v1821, 1
        %v1824 = vor.u32 %v1819, %v1823
        %v1826 = vshrl.u32 %v1780, 16
        %v1828 = vshll.u32 %v1780, 16
        %v1830 = vrot.slane %v1828, 1
        %v1831 = vor.u32 %v1826, %v1830
        %v1851 = vunpack.c.l.b16 %v1800
        %v1852 = vunpack.c.h.b16 %v1800
        %v1853 = vunpack.c.l.b16 %v1801
        %v1854 = vunpack.c.h.b16 %v1801
        %v1855 = vunpack.c.l.b16 %v1802
        %v1856 = vunpack.c.h.b16 %v1802
        %v1857 = vunpack.c.l.b16 %v1803
        %v1858 = vunpack.c.h.b16 %v1803
        %v1859 = vunpack.c.l.b16 %v1804
        %v1860 = vunpack.c.h.b16 %v1804
        %v1861 = vunpack.c.l.b16 %v1805
        %v1862 = vunpack.c.h.b16 %v1805
        %v1863 = vunpack.c.l.b16 %v1806
        %v1864 = vunpack.c.h.b16 %v1806
        %v1865 = vunpack.c.l.b16 %v1807
        %v1866 = vunpack.c.h.b16 %v1807
        %v1867 = vunpack.c.l.b16 %v1808
        %v1868 = vunpack.c.h.b16 %v1808
        %v1869 = vunpack.c.l.b16 %v1809
        %v1870 = vunpack.c.h.b16 %v1809
        %v1871 = vunpack.c.l.b16 %v1810
        %v1872 = vunpack.c.h.b16 %v1810
        %v1873 = vunpack.c.l.b16 %v1811
        %v1874 = vunpack.c.h.b16 %v1811
        %v1875 = vunpack.c.l.b16 %v1812
        %v1876 = vunpack.c.h.b16 %v1812
        %v1877 = vunpack.c.l.b16 %v1813
        %v1878 = vunpack.c.h.b16 %v1813
        %v1879 = vunpack.c.l.b16 %v1814
        %v1880 = vunpack.c.h.b16 %v1814
        %v1881 = vunpack.c.l.b16 %v1815
        %v1882 = vunpack.c.h.b16 %v1815
        %v1883 = vunpack.c.l.b16 %v1816
        %v1884 = vunpack.c.h.b16 %v1816
        %v1885 = vunpack.c.l.b16 %v1817
        %v1886 = vunpack.c.h.b16 %v1817
        %v1887 = vpack.c.b16 %v1853, %v1851
        %v1888 = vpack.c.b16 %v1854, %v1852
        %v1889 = vpack.c.b16 %v1857, %v1855
        %v1890 = vpack.c.b16 %v1858, %v1856
        %v1891 = vpack.c.b16 %v1861, %v1859
        %v1892 = vpack.c.b16 %v1862, %v1860
        %v1893 = vpack.c.b16 %v1865, %v1863
        %v1894 = vpack.c.b16 %v1866, %v1864
        %v1895 = vpack.c.b16 %v1869, %v1867
        %v1896 = vpack.c.b16 %v1870, %v1868
        %v1897 = vpack.c.b16 %v1873, %v1871
        %v1898 = vpack.c.b16 %v1874, %v1872
        %v1899 = vpack.c.b16 %v1877, %v1875
        %v1900 = vpack.c.b16 %v1878, %v1876
        %v1901 = vpack.c.b16 %v1881, %v1879
        %v1902 = vpack.c.b16 %v1882, %v1880
        %v1903 = vpack.c.b16 %v1885, %v1883
        %v1904 = vpack.c.b16 %v1886, %v1884
        %vm1923 = vcmask 130048
        %v1925 = vsel %vm1923, %v1831, 0
        %1927 = vmatprep.subr.bf16.mxu0 %v1888
        %1928 = vmatpush1.bf16.msra.mxu0 %v1887
        %1929 = vmatprep.subr.bf16.mxu0 %v1890
        %1930 = vmatpush1.bf16.msra.mxu0 %v1889
        %1931 = vmatprep.subr.bf16.mxu0 %v1892
        %1932 = vmatpush1.bf16.msra.mxu0 %v1891
        %1933 = vmatprep.subr.bf16.mxu0 %v1894
        %1934 = vmatpush1.bf16.msra.mxu0 %v1893
        %1935 = vmatprep.subr.bf16.mxu0 %v1896
        %1936 = vmatpush1.bf16.msra.mxu0 %v1895
        %1937 = vmatprep.subr.bf16.mxu0 %v1898
        %1938 = vmatpush1.bf16.msra.mxu0 %v1897
        %1939 = vmatprep.subr.bf16.mxu0 %v1900
        %1940 = vmatpush1.bf16.msra.mxu0 %v1899
        %1941 = vmatprep.subr.bf16.mxu0 %v1902
        %1942 = vmatpush1.bf16.msra.mxu0 %v1901
        %1943 = vmatprep.subr.bf16.mxu0 %v1904
        %1944 = vmatpush1.bf16.msra.mxu0 %v1903
        %1945 = vmatprep.subr.bf16.mxu0 0
        %1946 = vmatpush1.bf16.msra.mxu0 0
        %1947 = vmatprep.subr.bf16.mxu0 0
        %1948 = vmatpush1.bf16.msra.mxu0 0
        %1949 = vmatprep.subr.bf16.mxu0 0
        %1950 = vmatpush1.bf16.msra.mxu0 0
        %1951 = vmatprep.subr.bf16.mxu0 0
        %1952 = vmatpush1.bf16.msra.mxu0 0
        %1953 = vmatprep.subr.bf16.mxu0 0
        %1954 = vmatpush1.bf16.msra.mxu0 0
        %1955 = vmatprep.subr.bf16.mxu0 0
        %1956 = vmatpush1.bf16.msra.mxu0 0
        %1957 = vmatprep.subr.bf16.mxu0 0
        %1958 = vmatpush1.bf16.msra.mxu0 0
        %1959 = vmatprep.mubr.bf16.mxu0 %v1925
        %1960 = vmatmul.mubr.bf16.gmra.mrb[0].mxu0 %v1824
        %v1961 = vpop.f32.mrb[0].mxu0
        %v1962 = vadd.f32 0.0, %v1961
        %v1963 = vpop.f32.mrb[0].mxu0
        %v1964 = vadd.f32 0.0, %v1963
        %v1965 = vpop.f32.mrb[0].mxu0
        %v1966 = vpop.f32.mrb[0].mxu0
        %1967 = vdwg.mxu0
        %v1986 = vunpack.c.l.b16 %v1781
        %v1987 = vunpack.c.h.b16 %v1781
        %v1988 = vunpack.c.l.b16 %v1782
        %v1989 = vunpack.c.h.b16 %v1782
        %v1990 = vunpack.c.l.b16 %v1783
        %v1991 = vunpack.c.h.b16 %v1783
        %v1992 = vunpack.c.l.b16 %v1784
        %v1993 = vunpack.c.h.b16 %v1784
        %v1994 = vunpack.c.l.b16 %v1785
        %v1995 = vunpack.c.h.b16 %v1785
        %v1996 = vunpack.c.l.b16 %v1786
        %v1997 = vunpack.c.h.b16 %v1786
        %v1998 = vunpack.c.l.b16 %v1787
        %v1999 = vunpack.c.h.b16 %v1787
        %v2000 = vunpack.c.l.b16 %v1788
        %v2001 = vunpack.c.h.b16 %v1788
        %v2002 = vunpack.c.l.b16 %v1789
        %v2003 = vunpack.c.h.b16 %v1789
        %v2004 = vunpack.c.l.b16 %v1790
        %v2005 = vunpack.c.h.b16 %v1790
        %v2006 = vunpack.c.l.b16 %v1791
        %v2007 = vunpack.c.h.b16 %v1791
        %v2008 = vunpack.c.l.b16 %v1792
        %v2009 = vunpack.c.h.b16 %v1792
        %v2010 = vunpack.c.l.b16 %v1793
        %v2011 = vunpack.c.h.b16 %v1793
        %v2012 = vunpack.c.l.b16 %v1794
        %v2013 = vunpack.c.h.b16 %v1794
        %v2014 = vunpack.c.l.b16 %v1795
        %v2015 = vunpack.c.h.b16 %v1795
        %v2016 = vunpack.c.l.b16 %v1796
        %v2017 = vunpack.c.h.b16 %v1796
        %v2018 = vunpack.c.l.b16 %v1797
        %v2019 = vunpack.c.h.b16 %v1797
        %v2020 = vunpack.c.l.b16 %v1798
        %v2021 = vunpack.c.h.b16 %v1798
        %v2022 = vpack.c.b16 %v1988, %v1986
        %v2023 = vpack.c.b16 %v1989, %v1987
        %v2024 = vpack.c.b16 %v1992, %v1990
        %v2025 = vpack.c.b16 %v1993, %v1991
        %v2026 = vpack.c.b16 %v1996, %v1994
        %v2027 = vpack.c.b16 %v1997, %v1995
        %v2028 = vpack.c.b16 %v2000, %v1998
        %v2029 = vpack.c.b16 %v2001, %v1999
        %v2030 = vpack.c.b16 %v2004, %v2002
        %v2031 = vpack.c.b16 %v2005, %v2003
        %v2032 = vpack.c.b16 %v2008, %v2006
        %v2033 = vpack.c.b16 %v2009, %v2007
        %v2034 = vpack.c.b16 %v2012, %v2010
        %v2035 = vpack.c.b16 %v2013, %v2011
        %v2036 = vpack.c.b16 %v2016, %v2014
        %v2037 = vpack.c.b16 %v2017, %v2015
        %v2038 = vpack.c.b16 %v2020, %v2018
        %v2039 = vpack.c.b16 %v2021, %v2019
        %v2058 = vsel %vm1923, %v1780, 0
        %2060 = vmatprep.subr.bf16.mxu0 %v2023
        %2061 = vmatpush1.bf16.msra.mxu0 %v2022
        %2062 = vmatprep.subr.bf16.mxu0 %v2025
        %2063 = vmatpush1.bf16.msra.mxu0 %v2024
        %2064 = vmatprep.subr.bf16.mxu0 %v2027
        %2065 = vmatpush1.bf16.msra.mxu0 %v2026
        %2066 = vmatprep.subr.bf16.mxu0 %v2029
        %2067 = vmatpush1.bf16.msra.mxu0 %v2028
        %2068 = vmatprep.subr.bf16.mxu0 %v2031
        %2069 = vmatpush1.bf16.msra.mxu0 %v2030
        %2070 = vmatprep.subr.bf16.mxu0 %v2033
        %2071 = vmatpush1.bf16.msra.mxu0 %v2032
        %2072 = vmatprep.subr.bf16.mxu0 %v2035
        %2073 = vmatpush1.bf16.msra.mxu0 %v2034
        %2074 = vmatprep.subr.bf16.mxu0 %v2037
        %2075 = vmatpush1.bf16.msra.mxu0 %v2036
        %2076 = vmatprep.subr.bf16.mxu0 %v2039
        %2077 = vmatpush1.bf16.msra.mxu0 %v2038
        %2078 = vmatprep.subr.bf16.mxu0 0
        %2079 = vmatpush1.bf16.msra.mxu0 0
        %2080 = vmatprep.subr.bf16.mxu0 0
        %2081 = vmatpush1.bf16.msra.mxu0 0
        %2082 = vmatprep.subr.bf16.mxu0 0
        %2083 = vmatpush1.bf16.msra.mxu0 0
        %2084 = vmatprep.subr.bf16.mxu0 0
        %2085 = vmatpush1.bf16.msra.mxu0 0
        %2086 = vmatprep.subr.bf16.mxu0 0
        %2087 = vmatpush1.bf16.msra.mxu0 0
        %2088 = vmatprep.subr.bf16.mxu0 0
        %2089 = vmatpush1.bf16.msra.mxu0 0
        %2090 = vmatprep.subr.bf16.mxu0 0
        %2091 = vmatpush1.bf16.msra.mxu0 0
        %2092 = vmatprep.mubr.bf16.mxu0 %v2058
        %2093 = vmatmul.mubr.bf16.gmra.mrb[0].mxu0 %v1779
        %v2094 = vpop.f32.mrb[0].mxu0
        %v2095 = vadd.f32 %v1962, %v2094
        %v2096 = vpop.f32.mrb[0].mxu0
        %v2097 = vadd.f32 %v1964, %v2096
        %v2098 = vpop.f32.mrb[0].mxu0
        %v2099 = vpop.f32.mrb[0].mxu0
        %2100 = vdwg.mxu0
        %s2101 = scalar_lea.vmem [#allocation7], 288
        %v2102 = vld [vmem:[%s2101] sm:$0xff]
        %v2103 = vld [vmem:[%s2101 + $0x8] sm:$0xff]
        %v2104 = vld [vmem:[%s2101 + $0x10] sm:$0xff]
        %v2105 = vld [vmem:[%s2101 + $0x18] sm:$0xff]
        %v2106 = vld [vmem:[%s2101 + $0x20] sm:$0xff]
        %v2107 = vld [vmem:[%s2101 + $0x28] sm:$0xff]
        %v2108 = vld [vmem:[%s2101 + $0x30] sm:$0xff]
        %v2109 = vld [vmem:[%s2101 + $0x38] sm:$0xff]
        %v2110 = vld [vmem:[%s2101 + $0x40] sm:$0xff]
        %v2111 = vld [vmem:[%s2101 + $0x48] sm:$0xff]
        %v2112 = vld [vmem:[%s2101 + $0x50] sm:$0xff]
        %v2113 = vld [vmem:[%s2101 + $0x58] sm:$0xff]
        %v2114 = vld [vmem:[%s2101 + $0x60] sm:$0xff]
        %v2115 = vld [vmem:[%s2101 + $0x68] sm:$0xff]
        %v2116 = vld [vmem:[%s2101 + $0x70] sm:$0xff]
        %v2117 = vld [vmem:[%s2101 + $0x78] sm:$0xff]
        %v2118 = vld [vmem:[%s2101 + $0x80] sm:$0xff]
        %v2119 = vld [vmem:[%s2101 + $0x88] sm:$0xff]
        %v2122 = vrot.slane %v1779, 1
        %v2123 = vrot.slane %v1780, 1
        %v2143 = vunpack.c.l.b16 %v2102
        %v2144 = vunpack.c.h.b16 %v2102
        %v2145 = vunpack.c.l.b16 %v2103
        %v2146 = vunpack.c.h.b16 %v2103
        %v2147 = vunpack.c.l.b16 %v2104
        %v2148 = vunpack.c.h.b16 %v2104
        %v2149 = vunpack.c.l.b16 %v2105
        %v2150 = vunpack.c.h.b16 %v2105
        %v2151 = vunpack.c.l.b16 %v2106
        %v2152 = vunpack.c.h.b16 %v2106
        %v2153 = vunpack.c.l.b16 %v2107
        %v2154 = vunpack.c.h.b16 %v2107
        %v2155 = vunpack.c.l.b16 %v2108
        %v2156 = vunpack.c.h.b16 %v2108
        %v2157 = vunpack.c.l.b16 %v2109
        %v2158 = vunpack.c.h.b16 %v2109
        %v2159 = vunpack.c.l.b16 %v2110
        %v2160 = vunpack.c.h.b16 %v2110
        %v2161 = vunpack.c.l.b16 %v2111
        %v2162 = vunpack.c.h.b16 %v2111
        %v2163 = vunpack.c.l.b16 %v2112
        %v2164 = vunpack.c.h.b16 %v2112
        %v2165 = vunpack.c.l.b16 %v2113
        %v2166 = vunpack.c.h.b16 %v2113
        %v2167 = vunpack.c.l.b16 %v2114
        %v2168 = vunpack.c.h.b16 %v2114
        %v2169 = vunpack.c.l.b16 %v2115
        %v2170 = vunpack.c.h.b16 %v2115
        %v2171 = vunpack.c.l.b16 %v2116
        %v2172 = vunpack.c.h.b16 %v2116
        %v2173 = vunpack.c.l.b16 %v2117
        %v2174 = vunpack.c.h.b16 %v2117
        %v2175 = vunpack.c.l.b16 %v2118
        %v2176 = vunpack.c.h.b16 %v2118
        %v2177 = vunpack.c.l.b16 %v2119
        %v2178 = vunpack.c.h.b16 %v2119
        %v2179 = vpack.c.b16 %v2145, %v2143
        %v2180 = vpack.c.b16 %v2146, %v2144
        %v2181 = vpack.c.b16 %v2149, %v2147
        %v2182 = vpack.c.b16 %v2150, %v2148
        %v2183 = vpack.c.b16 %v2153, %v2151
        %v2184 = vpack.c.b16 %v2154, %v2152
        %v2185 = vpack.c.b16 %v2157, %v2155
        %v2186 = vpack.c.b16 %v2158, %v2156
        %v2187 = vpack.c.b16 %v2161, %v2159
        %v2188 = vpack.c.b16 %v2162, %v2160
        %v2189 = vpack.c.b16 %v2165, %v2163
        %v2190 = vpack.c.b16 %v2166, %v2164
        %v2191 = vpack.c.b16 %v2169, %v2167
        %v2192 = vpack.c.b16 %v2170, %v2168
        %v2193 = vpack.c.b16 %v2173, %v2171
        %v2194 = vpack.c.b16 %v2174, %v2172
        %v2195 = vpack.c.b16 %v2177, %v2175
        %v2196 = vpack.c.b16 %v2178, %v2176
        %v2216 = vsel %vm1923, %v2123, 0
        %2218 = vmatprep.subr.bf16.mxu0 %v2180
        %2219 = vmatpush1.bf16.msra.mxu0 %v2179
        %2220 = vmatprep.subr.bf16.mxu0 %v2182
        %2221 = vmatpush1.bf16.msra.mxu0 %v2181
        %2222 = vmatprep.subr.bf16.mxu0 %v2184
        %2223 = vmatpush1.bf16.msra.mxu0 %v2183
        %2224 = vmatprep.subr.bf16.mxu0 %v2186
        %2225 = vmatpush1.bf16.msra.mxu0 %v2185
        %2226 = vmatprep.subr.bf16.mxu0 %v2188
        %2227 = vmatpush1.bf16.msra.mxu0 %v2187
        %2228 = vmatprep.subr.bf16.mxu0 %v2190
        %2229 = vmatpush1.bf16.msra.mxu0 %v2189
        %2230 = vmatprep.subr.bf16.mxu0 %v2192
        %2231 = vmatpush1.bf16.msra.mxu0 %v2191
        %2232 = vmatprep.subr.bf16.mxu0 %v2194
        %2233 = vmatpush1.bf16.msra.mxu0 %v2193
        %2234 = vmatprep.subr.bf16.mxu0 %v2196
        %2235 = vmatpush1.bf16.msra.mxu0 %v2195
        %2236 = vmatprep.subr.bf16.mxu0 0
        %2237 = vmatpush1.bf16.msra.mxu0 0
        %2238 = vmatprep.subr.bf16.mxu0 0
        %2239 = vmatpush1.bf16.msra.mxu0 0
        %2240 = vmatprep.subr.bf16.mxu0 0
        %2241 = vmatpush1.bf16.msra.mxu0 0
        %2242 = vmatprep.subr.bf16.mxu0 0
        %2243 = vmatpush1.bf16.msra.mxu0 0
        %2244 = vmatprep.subr.bf16.mxu0 0
        %2245 = vmatpush1.bf16.msra.mxu0 0
        %2246 = vmatprep.subr.bf16.mxu0 0
        %2247 = vmatpush1.bf16.msra.mxu0 0
        %2248 = vmatprep.subr.bf16.mxu0 0
        %2249 = vmatpush1.bf16.msra.mxu0 0
        %2250 = vmatprep.mubr.bf16.mxu0 %v2216
        %2251 = vmatmul.mubr.bf16.gmra.mrb[0].mxu0 %v2122
        %v2252 = vpop.f32.mrb[0].mxu0
        %v2253 = vadd.f32 0.0, %v2252
        %v2254 = vpop.f32.mrb[0].mxu0
        %v2255 = vadd.f32 0.0, %v2254
        %v2256 = vpop.f32.mrb[0].mxu0
        %v2257 = vpop.f32.mrb[0].mxu0
        %2258 = vdwg.mxu0
        %v2259 = vadd.f32 %v2095, %v2253
        %v2260 = vadd.f32 %v2097, %v2255
        %v2261 = vld [vmem:[%s5] sm:$0x3]
        %v2263 = vlaneseq
        %v2264 = vshrl.u32 %v2263, 7
        %v2265 = vsub.s32 0, %v2264
        %v2266 = vrot.slane %v2261, %v2265
        %v2267 = vlaneseq
        %v2268 = vshrl.u32 %v2267, 7
        %v2269 = vsub.s32 1, %v2268
        %v2270 = vrot.slane %v2261, %v2269
        %v2273 = vadd.f32 %v2259, %v2266
        %v2274 = vadd.f32 %v2260, %v2270
        %v2275 = vmax.f32 %v2273, 0.0
        %v2276 = vmax.f32 %v2274, 0.0
        %v2277 = vmax.f32 %v2275, %v2276
        %v2278 = vpack.c.bf16 %v2277, %v2277
        %v2279 = vld [vmem:[%s6] sm:$0xf]
        %v2280 = vld [vmem:[%s6 + $0x4] sm:$0xf]
        %v2281 = vld [vmem:[%s6 + $0x8] sm:$0xf]
        %v2282 = vld [vmem:[%s6 + $0xc] sm:$0xf]
        %v2283 = vld [vmem:[%s6 + $0x10] sm:$0xf]
        %v2284 = vld [vmem:[%s6 + $0x14] sm:$0xf]
        %v2285 = vld [vmem:[%s6 + $0x18] sm:$0xf]
        %v2286 = vld [vmem:[%s6 + $0x1c] sm:$0xf]
        %v2287 = vld [vmem:[%s6 + $0x20] sm:$0xf]
        %v2288 = vld [vmem:[%s6 + $0x24] sm:$0xf]
        %v2289 = vld [vmem:[%s6 + $0x28] sm:$0xf]
        %v2290 = vld [vmem:[%s6 + $0x2c] sm:$0xf]
        %v2291 = vld [vmem:[%s6 + $0x30] sm:$0xf]
        %v2292 = vld [vmem:[%s6 + $0x34] sm:$0xf]
        %v2293 = vld [vmem:[%s6 + $0x38] sm:$0xf]
        %v2294 = vld [vmem:[%s6 + $0x3c] sm:$0xf]
        %v2311 = vunpack.c.l.b16 %v2279
        %v2312 = vunpack.c.l.b16 %v2280
        %v2313 = vunpack.c.l.b16 %v2281
        %v2314 = vunpack.c.l.b16 %v2282
        %v2315 = vunpack.c.l.b16 %v2283
        %v2316 = vunpack.c.l.b16 %v2284
        %v2317 = vunpack.c.l.b16 %v2285
        %v2318 = vunpack.c.l.b16 %v2286
        %v2319 = vunpack.c.l.b16 %v2287
        %v2320 = vunpack.c.l.b16 %v2288
        %v2321 = vunpack.c.l.b16 %v2289
        %v2322 = vunpack.c.l.b16 %v2290
        %v2323 = vunpack.c.l.b16 %v2291
        %v2324 = vunpack.c.l.b16 %v2292
        %v2325 = vunpack.c.l.b16 %v2293
        %v2326 = vunpack.c.l.b16 %v2294
        %v2327 = vpack.c.b16 %v2312, %v2311
        %v2328 = vpack.c.b16 %v2314, %v2313
        %v2329 = vpack.c.b16 %v2316, %v2315
        %v2330 = vpack.c.b16 %v2318, %v2317
        %v2331 = vpack.c.b16 %v2320, %v2319
        %v2332 = vpack.c.b16 %v2322, %v2321
        %v2333 = vpack.c.b16 %v2324, %v2323
        %v2334 = vpack.c.b16 %v2326, %v2325
        %2343 = vmatprep.subr.bf16.mxu0 0
        %2344 = vmatpush1.bf16.msra.mxu0 %v2327
        %2345 = vmatprep.subr.bf16.mxu0 0
        %2346 = vmatpush1.bf16.msra.mxu0 %v2328
        %2347 = vmatprep.subr.bf16.mxu0 0
        %2348 = vmatpush1.bf16.msra.mxu0 %v2329
        %2349 = vmatprep.subr.bf16.mxu0 0
        %2350 = vmatpush1.bf16.msra.mxu0 %v2330
        %2351 = vmatprep.subr.bf16.mxu0 0
        %2352 = vmatpush1.bf16.msra.mxu0 %v2331
        %2353 = vmatprep.subr.bf16.mxu0 0
        %2354 = vmatpush1.bf16.msra.mxu0 %v2332
        %2355 = vmatprep.subr.bf16.mxu0 0
        %2356 = vmatpush1.bf16.msra.mxu0 %v2333
        %2357 = vmatprep.subr.bf16.mxu0 0
        %2358 = vmatpush1.bf16.msra.mxu0 %v2334
        %2359 = vmatprep.subr.bf16.mxu0 0
        %2360 = vmatpush1.bf16.msra.mxu0 0
        %2361 = vmatprep.subr.bf16.mxu0 0
        %2362 = vmatpush1.bf16.msra.mxu0 0
        %2363 = vmatprep.subr.bf16.mxu0 0
        %2364 = vmatpush1.bf16.msra.mxu0 0
        %2365 = vmatprep.subr.bf16.mxu0 0
        %2366 = vmatpush1.bf16.msra.mxu0 0
        %2367 = vmatprep.subr.bf16.mxu0 0
        %2368 = vmatpush1.bf16.msra.mxu0 0
        %2369 = vmatprep.subr.bf16.mxu0 0
        %2370 = vmatpush1.bf16.msra.mxu0 0
        %2371 = vmatprep.subr.bf16.mxu0 0
        %2372 = vmatpush1.bf16.msra.mxu0 0
        %2373 = vmatprep.subr.bf16.mxu0 0
        %2374 = vmatpush1.bf16.msra.mxu0 0
        %2375 = vmatprep.mubr.bf16.mxu0 0
        %2376 = vmatmul.mubr.bf16.gmra.mrb[0].mxu0 %v2278
        %v2377 = vpop.f32.mrb[0].mxu0
        %v2378 = vadd.f32 0.0, %v2377
        %v2379 = vpop.f32.mrb[0].mxu0
        %v2380 = vpop.f32.mrb[0].mxu0
        %v2381 = vpop.f32.mrb[0].mxu0
        %2382 = vdwg.mxu0
        %2384 = vrot.lane.b32.xlu0 %v2378, 64
        %v2385 = vpop.permute.xlu0 %2384
        %v2387 = vmax.f32 %v2378, %v2385
        %v2388 = vpack.c.bf16 %v2387, %v2387
        %v2389 = vld [vmem:[%s7] sm:$0xf]
        %v2390 = vld [vmem:[%s7 + $0x4] sm:$0xf]
        %v2391 = vld [vmem:[%s7 + $0x8] sm:$0xf]
        %v2392 = vld [vmem:[%s7 + $0xc] sm:$0xf]
        %v2393 = vld [vmem:[%s7 + $0x10] sm:$0xf]
        %v2394 = vld [vmem:[%s7 + $0x14] sm:$0xf]
        %v2395 = vld [vmem:[%s7 + $0x18] sm:$0xf]
        %v2396 = vld [vmem:[%s7 + $0x1c] sm:$0xf]
        %s2397 = scalar_lea.vmem %s7, 32
        %v2398 = vld [vmem:[%s2397] sm:$0xf]
        %v2399 = vld [vmem:[%s2397 + $0x4] sm:$0xf]
        %v2400 = vld [vmem:[%s2397 + $0x8] sm:$0xf]
        %v2401 = vld [vmem:[%s2397 + $0xc] sm:$0xf]
        %v2402 = vld [vmem:[%s2397 + $0x10] sm:$0xf]
        %v2403 = vld [vmem:[%s2397 + $0x14] sm:$0xf]
        %v2404 = vld [vmem:[%s2397 + $0x18] sm:$0xf]
        %v2405 = vld [vmem:[%s2397 + $0x1c] sm:$0xf]
        %v2407 = vshrl.u32 %v2388, 16
        %v2417 = vunpack.c.l.b16 %v2398
        %v2418 = vunpack.c.l.b16 %v2399
        %v2419 = vunpack.c.l.b16 %v2400
        %v2420 = vunpack.c.l.b16 %v2401
        %v2421 = vunpack.c.l.b16 %v2402
        %v2422 = vunpack.c.l.b16 %v2403
        %v2423 = vunpack.c.l.b16 %v2404
        %v2424 = vunpack.c.l.b16 %v2405
        %v2425 = vpack.c.b16 %v2418, %v2417
        %v2426 = vpack.c.b16 %v2420, %v2419
        %v2427 = vpack.c.b16 %v2422, %v2421
        %v2428 = vpack.c.b16 %v2424, %v2423
        %vm2433 = vcmask 523264
        %v2435 = vsel %vm2433, %v2407, 0
        %2437 = vmatprep.subr.bf16.mxu0 0
        %2438 = vmatpush1.bf16.msra.mxu0 %v2425
        %2439 = vmatprep.subr.bf16.mxu0 0
        %2440 = vmatpush1.bf16.msra.mxu0 %v2426
        %2441 = vmatprep.subr.bf16.mxu0 0
        %2442 = vmatpush1.bf16.msra.mxu0 %v2427
        %2443 = vmatprep.subr.bf16.mxu0 0
        %2444 = vmatpush1.bf16.msra.mxu0 %v2428
        %2445 = vmatprep.subr.bf16.mxu0 0
        %2446 = vmatpush1.bf16.msra.mxu0 0
        %2447 = vmatprep.subr.bf16.mxu0 0
        %2448 = vmatpush1.bf16.msra.mxu0 0
        %2449 = vmatprep.subr.bf16.mxu0 0
        %2450 = vmatpush1.bf16.msra.mxu0 0
        %2451 = vmatprep.subr.bf16.mxu0 0
        %2452 = vmatpush1.bf16.msra.mxu0 0
        %2453 = vmatprep.subr.bf16.mxu0 0
        %2454 = vmatpush1.bf16.msra.mxu0 0
        %2455 = vmatprep.subr.bf16.mxu0 0
        %2456 = vmatpush1.bf16.msra.mxu0 0
        %2457 = vmatprep.subr.bf16.mxu0 0
        %2458 = vmatpush1.bf16.msra.mxu0 0
        %2459 = vmatprep.subr.bf16.mxu0 0
        %2460 = vmatpush1.bf16.msra.mxu0 0
        %2461 = vmatprep.subr.bf16.mxu0 0
        %2462 = vmatpush1.bf16.msra.mxu0 0
        %2463 = vmatprep.subr.bf16.mxu0 0
        %2464 = vmatpush1.bf16.msra.mxu0 0
        %2465 = vmatprep.subr.bf16.mxu0 0
        %2466 = vmatpush1.bf16.msra.mxu0 0
        %2467 = vmatprep.subr.bf16.mxu0 0
        %2468 = vmatpush1.bf16.msra.mxu0 0
        %2469 = vmatprep.mubr.bf16.mxu0 0
        %2470 = vmatmul.mubr.bf16.gmra.mrb[0].mxu0 %v2435
        %v2471 = vpop.f32.mrb[0].mxu0
        %v2472 = vadd.f32 0.0, %v2471
        %v2473 = vpop.f32.mrb[0].mxu0
        %v2474 = vpop.f32.mrb[0].mxu0
        %v2475 = vpop.f32.mrb[0].mxu0
        %2476 = vdwg.mxu0
        %v2485 = vunpack.c.l.b16 %v2389
        %v2486 = vunpack.c.l.b16 %v2390
        %v2487 = vunpack.c.l.b16 %v2391
        %v2488 = vunpack.c.l.b16 %v2392
        %v2489 = vunpack.c.l.b16 %v2393
        %v2490 = vunpack.c.l.b16 %v2394
        %v2491 = vunpack.c.l.b16 %v2395
        %v2492 = vunpack.c.l.b16 %v2396
        %v2493 = vpack.c.b16 %v2486, %v2485
        %v2494 = vpack.c.b16 %v2488, %v2487
        %v2495 = vpack.c.b16 %v2490, %v2489
        %v2496 = vpack.c.b16 %v2492, %v2491
        %v2501 = vsel %vm2433, %v2388, 0
        %2503 = vmatprep.subr.bf16.mxu0 0
        %2504 = vmatpush1.bf16.msra.mxu0 %v2493
        %2505 = vmatprep.subr.bf16.mxu0 0
        %2506 = vmatpush1.bf16.msra.mxu0 %v2494
        %2507 = vmatprep.subr.bf16.mxu0 0
        %2508 = vmatpush1.bf16.msra.mxu0 %v2495
        %2509 = vmatprep.subr.bf16.mxu0 0
        %2510 = vmatpush1.bf16.msra.mxu0 %v2496
        %2511 = vmatprep.subr.bf16.mxu0 0
        %2512 = vmatpush1.bf16.msra.mxu0 0
        %2513 = vmatprep.subr.bf16.mxu0 0
        %2514 = vmatpush1.bf16.msra.mxu0 0
        %2515 = vmatprep.subr.bf16.mxu0 0
        %2516 = vmatpush1.bf16.msra.mxu0 0
        %2517 = vmatprep.subr.bf16.mxu0 0
        %2518 = vmatpush1.bf16.msra.mxu0 0
        %2519 = vmatprep.subr.bf16.mxu0 0
        %2520 = vmatpush1.bf16.msra.mxu0 0
        %2521 = vmatprep.subr.bf16.mxu0 0
        %2522 = vmatpush1.bf16.msra.mxu0 0
        %2523 = vmatprep.subr.bf16.mxu0 0
        %2524 = vmatpush1.bf16.msra.mxu0 0
        %2525 = vmatprep.subr.bf16.mxu0 0
        %2526 = vmatpush1.bf16.msra.mxu0 0
        %2527 = vmatprep.subr.bf16.mxu0 0
        %2528 = vmatpush1.bf16.msra.mxu0 0
        %2529 = vmatprep.subr.bf16.mxu0 0
        %2530 = vmatpush1.bf16.msra.mxu0 0
        %2531 = vmatprep.subr.bf16.mxu0 0
        %2532 = vmatpush1.bf16.msra.mxu0 0
        %2533 = vmatprep.subr.bf16.mxu0 0
        %2534 = vmatpush1.bf16.msra.mxu0 0
        %2535 = vmatprep.mubr.bf16.mxu0 0
        %2536 = vmatmul.mubr.bf16.gmra.mrb[0].mxu0 %v2501
        %v2537 = vpop.f32.mrb[0].mxu0
        %v2538 = vadd.f32 %v2472, %v2537
        %v2539 = vpop.f32.mrb[0].mxu0
        %v2540 = vpop.f32.mrb[0].mxu0
        %v2541 = vpop.f32.mrb[0].mxu0
        %2542 = vdwg.mxu0
        %s2543 = scalar_lea.vmem %s7, 64
        %v2544 = vld [vmem:[%s2543] sm:$0xf]
        %v2545 = vld [vmem:[%s2543 + $0x4] sm:$0xf]
        %v2546 = vld [vmem:[%s2543 + $0x8] sm:$0xf]
        %v2547 = vld [vmem:[%s2543 + $0xc] sm:$0xf]
        %v2548 = vld [vmem:[%s2543 + $0x10] sm:$0xf]
        %v2549 = vld [vmem:[%s2543 + $0x14] sm:$0xf]
        %v2550 = vld [vmem:[%s2543 + $0x18] sm:$0xf]
        %v2551 = vld [vmem:[%s2543 + $0x1c] sm:$0xf]
        %v2553 = vrot.slane %v2388, 1
        %v2562 = vunpack.c.l.b16 %v2544
        %v2563 = vunpack.c.l.b16 %v2545
        %v2564 = vunpack.c.l.b16 %v2546
        %v2565 = vunpack.c.l.b16 %v2547
        %v2566 = vunpack.c.l.b16 %v2548
        %v2567 = vunpack.c.l.b16 %v2549
        %v2568 = vunpack.c.l.b16 %v2550
        %v2569 = vunpack.c.l.b16 %v2551
        %v2570 = vpack.c.b16 %v2563, %v2562
        %v2571 = vpack.c.b16 %v2565, %v2564
        %v2572 = vpack.c.b16 %v2567, %v2566
        %v2573 = vpack.c.b16 %v2569, %v2568
        %v2579 = vsel %vm2433, %v2553, 0
        %2581 = vmatprep.subr.bf16.mxu0 0
        %2582 = vmatpush1.bf16.msra.mxu0 %v2570
        %2583 = vmatprep.subr.bf16.mxu0 0
        %2584 = vmatpush1.bf16.msra.mxu0 %v2571
        %2585 = vmatprep.subr.bf16.mxu0 0
        %2586 = vmatpush1.bf16.msra.mxu0 %v2572
        %2587 = vmatprep.subr.bf16.mxu0 0
        %2588 = vmatpush1.bf16.msra.mxu0 %v2573
        %2589 = vmatprep.subr.bf16.mxu0 0
        %2590 = vmatpush1.bf16.msra.mxu0 0
        %2591 = vmatprep.subr.bf16.mxu0 0
        %2592 = vmatpush1.bf16.msra.mxu0 0
        %2593 = vmatprep.subr.bf16.mxu0 0
        %2594 = vmatpush1.bf16.msra.mxu0 0
        %2595 = vmatprep.subr.bf16.mxu0 0
        %2596 = vmatpush1.bf16.msra.mxu0 0
        %2597 = vmatprep.subr.bf16.mxu0 0
        %2598 = vmatpush1.bf16.msra.mxu0 0
        %2599 = vmatprep.subr.bf16.mxu0 0
        %2600 = vmatpush1.bf16.msra.mxu0 0
        %2601 = vmatprep.subr.bf16.mxu0 0
        %2602 = vmatpush1.bf16.msra.mxu0 0
        %2603 = vmatprep.subr.bf16.mxu0 0
        %2604 = vmatpush1.bf16.msra.mxu0 0
        %2605 = vmatprep.subr.bf16.mxu0 0
        %2606 = vmatpush1.bf16.msra.mxu0 0
        %2607 = vmatprep.subr.bf16.mxu0 0
        %2608 = vmatpush1.bf16.msra.mxu0 0
        %2609 = vmatprep.subr.bf16.mxu0 0
        %2610 = vmatpush1.bf16.msra.mxu0 0
        %2611 = vmatprep.subr.bf16.mxu0 0
        %2612 = vmatpush1.bf16.msra.mxu0 0
        %2613 = vmatprep.mubr.bf16.mxu0 0
        %2614 = vmatmul.mubr.bf16.gmra.mrb[0].mxu0 %v2579
        %v2615 = vpop.f32.mrb[0].mxu0
        %v2616 = vadd.f32 0.0, %v2615
        %v2617 = vpop.f32.mrb[0].mxu0
        %v2618 = vpop.f32.mrb[0].mxu0
        %v2619 = vpop.f32.mrb[0].mxu0
        %2620 = vdwg.mxu0
        %v2621 = vadd.f32 %v2538, %v2616
        %s2622 = scalar_lea.vmem %s7, 96
        %v2623 = vld [vmem:[%s2622] sm:$0xf]
        %v2624 = vld [vmem:[%s2622 + $0x4] sm:$0xf]
        %v2625 = vld [vmem:[%s2622 + $0x8] sm:$0xf]
        %v2626 = vld [vmem:[%s2622 + $0xc] sm:$0xf]
        %v2627 = vld [vmem:[%s2622 + $0x10] sm:$0xf]
        %v2628 = vld [vmem:[%s2622 + $0x14] sm:$0xf]
        %v2629 = vld [vmem:[%s2622 + $0x18] sm:$0xf]
        %v2630 = vld [vmem:[%s2622 + $0x1c] sm:$0xf]
        %v2631 = vrot.slane %v2407, 1
        %v2640 = vunpack.c.l.b16 %v2623
        %v2641 = vunpack.c.l.b16 %v2624
        %v2642 = vunpack.c.l.b16 %v2625
        %v2643 = vunpack.c.l.b16 %v2626
        %v2644 = vunpack.c.l.b16 %v2627
        %v2645 = vunpack.c.l.b16 %v2628
        %v2646 = vunpack.c.l.b16 %v2629
        %v2647 = vunpack.c.l.b16 %v2630
        %v2648 = vpack.c.b16 %v2641, %v2640
        %v2649 = vpack.c.b16 %v2643, %v2642
        %v2650 = vpack.c.b16 %v2645, %v2644
        %v2651 = vpack.c.b16 %v2647, %v2646
        %v2657 = vsel %vm2433, %v2631, 0
        %2659 = vmatprep.subr.bf16.mxu0 0
        %2660 = vmatpush1.bf16.msra.mxu0 %v2648
        %2661 = vmatprep.subr.bf16.mxu0 0
        %2662 = vmatpush1.bf16.msra.mxu0 %v2649
        %2663 = vmatprep.subr.bf16.mxu0 0
        %2664 = vmatpush1.bf16.msra.mxu0 %v2650
        %2665 = vmatprep.subr.bf16.mxu0 0
        %2666 = vmatpush1.bf16.msra.mxu0 %v2651
        %2667 = vmatprep.subr.bf16.mxu0 0
        %2668 = vmatpush1.bf16.msra.mxu0 0
        %2669 = vmatprep.subr.bf16.mxu0 0
        %2670 = vmatpush1.bf16.msra.mxu0 0
        %2671 = vmatprep.subr.bf16.mxu0 0
        %2672 = vmatpush1.bf16.msra.mxu0 0
        %2673 = vmatprep.subr.bf16.mxu0 0
        %2674 = vmatpush1.bf16.msra.mxu0 0
        %2675 = vmatprep.subr.bf16.mxu0 0
        %2676 = vmatpush1.bf16.msra.mxu0 0
        %2677 = vmatprep.subr.bf16.mxu0 0
        %2678 = vmatpush1.bf16.msra.mxu0 0
        %2679 = vmatprep.subr.bf16.mxu0 0
        %2680 = vmatpush1.bf16.msra.mxu0 0
        %2681 = vmatprep.subr.bf16.mxu0 0
        %2682 = vmatpush1.bf16.msra.mxu0 0
        %2683 = vmatprep.subr.bf16.mxu0 0
        %2684 = vmatpush1.bf16.msra.mxu0 0
        %2685 = vmatprep.subr.bf16.mxu0 0
        %2686 = vmatpush1.bf16.msra.mxu0 0
        %2687 = vmatprep.subr.bf16.mxu0 0
        %2688 = vmatpush1.bf16.msra.mxu0 0
        %2689 = vmatprep.subr.bf16.mxu0 0
        %2690 = vmatpush1.bf16.msra.mxu0 0
        %2691 = vmatprep.mubr.bf16.mxu0 0
        %2692 = vmatmul.mubr.bf16.gmra.mrb[0].mxu0 %v2657
        %v2693 = vpop.f32.mrb[0].mxu0
        %v2694 = vadd.f32 0.0, %v2693
        %v2695 = vpop.f32.mrb[0].mxu0
        %v2696 = vpop.f32.mrb[0].mxu0
        %v2697 = vpop.f32.mrb[0].mxu0
        %2698 = vdwg.mxu0
        %v2699 = vadd.f32 %v2621, %v2694
        %v2700 = vld [vmem:[%s8] sm:$0x1]
        %v2701 = vadd.f32 %v2699, %v2700
        %v2702 = vmax.f32 %v2701, 0.0
        %v2703 = vpack.c.bf16 %v2702, %v2702
        %v2704 = vld [vmem:[%s9] sm:$0xf]
        %v2705 = vld [vmem:[%s9 + $0x4] sm:$0xf]
        %v2706 = vld [vmem:[%s9 + $0x8] sm:$0xf]
        %v2707 = vld [vmem:[%s9 + $0xc] sm:$0xf]
        %v2708 = vld [vmem:[%s9 + $0x10] sm:$0xf]
        %v2709 = vld [vmem:[%s9 + $0x14] sm:$0xf]
        %v2710 = vld [vmem:[%s9 + $0x18] sm:$0xf]
        %v2711 = vld [vmem:[%s9 + $0x1c] sm:$0xf]
        %v2712 = vld [vmem:[%s9 + $0x20] sm:$0xf]
        %v2713 = vld [vmem:[%s9 + $0x24] sm:$0xf]
        %v2714 = vld [vmem:[%s9 + $0x28] sm:$0xf]
        %v2715 = vld [vmem:[%s9 + $0x2c] sm:$0xf]
        %v2716 = vld [vmem:[%s9 + $0x30] sm:$0xf]
        %v2717 = vld [vmem:[%s9 + $0x34] sm:$0xf]
        %v2718 = vld [vmem:[%s9 + $0x38] sm:$0xf]
        %v2719 = vld [vmem:[%s10] sm:$0x1]
        %v2735 = vunpack.c.l.b16 %v2704
        %v2736 = vunpack.c.l.b16 %v2705
        %v2737 = vunpack.c.l.b16 %v2706
        %v2738 = vunpack.c.l.b16 %v2707
        %v2739 = vunpack.c.l.b16 %v2708
        %v2740 = vunpack.c.l.b16 %v2709
        %v2741 = vunpack.c.l.b16 %v2710
        %v2742 = vunpack.c.l.b16 %v2711
        %v2743 = vunpack.c.l.b16 %v2712
        %v2744 = vunpack.c.l.b16 %v2713
        %v2745 = vunpack.c.l.b16 %v2714
        %v2746 = vunpack.c.l.b16 %v2715
        %v2747 = vunpack.c.l.b16 %v2716
        %v2748 = vunpack.c.l.b16 %v2717
        %v2749 = vunpack.c.l.b16 %v2718
        %v2750 = vpack.c.b16 %v2736, %v2735
        %v2751 = vpack.c.b16 %v2738, %v2737
        %v2752 = vpack.c.b16 %v2740, %v2739
        %v2753 = vpack.c.b16 %v2742, %v2741
        %v2754 = vpack.c.b16 %v2744, %v2743
        %v2755 = vpack.c.b16 %v2746, %v2745
        %v2756 = vpack.c.b16 %v2748, %v2747
        %v2757 = vpack.c.b16 %v2749, %v2749
        %vm2765 = vcmask 982016
        %v2767 = vsel %vm2765, %v2703, 0
        %vm2769 = vcmask 1043456
        %v2771 = vsel %vm2769, %v2757, 0
        %2773 = vmatprep.subr.bf16.mxu0 0
        %2774 = vmatpush1.bf16.msra.mxu0 %v2750
        %2775 = vmatprep.subr.bf16.mxu0 0
        %2776 = vmatpush1.bf16.msra.mxu0 %v2751
        %2777 = vmatprep.subr.bf16.mxu0 0
        %2778 = vmatpush1.bf16.msra.mxu0 %v2752
        %2779 = vmatprep.subr.bf16.mxu0 0
        %2780 = vmatpush1.bf16.msra.mxu0 %v2753
        %2781 = vmatprep.subr.bf16.mxu0 0
        %2782 = vmatpush1.bf16.msra.mxu0 %v2754
        %2783 = vmatprep.subr.bf16.mxu0 0
        %2784 = vmatpush1.bf16.msra.mxu0 %v2755
        %2785 = vmatprep.subr.bf16.mxu0 0
        %2786 = vmatpush1.bf16.msra.mxu0 %v2756
        %2787 = vmatprep.subr.bf16.mxu0 0
        %2788 = vmatpush1.bf16.msra.mxu0 %v2771
        %2789 = vmatprep.subr.bf16.mxu0 0
        %2790 = vmatpush1.bf16.msra.mxu0 0
        %2791 = vmatprep.subr.bf16.mxu0 0
        %2792 = vmatpush1.bf16.msra.mxu0 0
        %2793 = vmatprep.subr.bf16.mxu0 0
        %2794 = vmatpush1.bf16.msra.mxu0 0
        %2795 = vmatprep.subr.bf16.mxu0 0
        %2796 = vmatpush1.bf16.msra.mxu0 0
        %2797 = vmatprep.subr.bf16.mxu0 0
        %2798 = vmatpush1.bf16.msra.mxu0 0
        %2799 = vmatprep.subr.bf16.mxu0 0
        %2800 = vmatpush1.bf16.msra.mxu0 0
        %2801 = vmatprep.subr.bf16.mxu0 0
        %2802 = vmatpush1.bf16.msra.mxu0 0
        %2803 = vmatprep.subr.bf16.mxu0 0
        %2804 = vmatpush1.bf16.msra.mxu0 0
        %2805 = vmatprep.mubr.bf16.mxu0 0
        %2806 = vmatmul.mubr.bf16.gmra.mrb[0].mxu0 %v2767
        %v2807 = vpop.f32.mrb[0].mxu0
        %v2808 = vadd.f32 %v2719, %v2807
        %v2809 = vpop.f32.mrb[0].mxu0
        %v2810 = vpop.f32.mrb[0].mxu0
        %v2811 = vpop.f32.mrb[0].mxu0
        %2812 = vdwg.mxu0
        %v2813 = vmax.f32 %v2808, 0.0
        %v2814 = vpack.c.bf16 %v2813, %v2813
        %v2815 = vld [vmem:[%s11] sm:$0xf]
        %v2816 = vld [vmem:[%s11 + $0x4] sm:$0xf]
        %v2817 = vld [vmem:[%s11 + $0x8] sm:$0xf]
        %v2818 = vld [vmem:[%s11 + $0xc] sm:$0xf]
        %v2819 = vld [vmem:[%s11 + $0x10] sm:$0xf]
        %v2820 = vld [vmem:[%s11 + $0x14] sm:$0xf]
        %v2821 = vld [vmem:[%s11 + $0x18] sm:$0xf]
        %v2822 = vld [vmem:[%s11 + $0x1c] sm:$0xf]
        %v2823 = vld [vmem:[%s11 + $0x20] sm:$0xf]
        %v2824 = vld [vmem:[%s11 + $0x24] sm:$0xf]
        %v2825 = vld [vmem:[%s11 + $0x28] sm:$0x3]
        %v2826 = vld [vmem:[%s12] sm:$0x1]
        %v2838 = vunpack.c.l.b16 %v2815
        %v2839 = vunpack.c.l.b16 %v2816
        %v2840 = vunpack.c.l.b16 %v2817
        %v2841 = vunpack.c.l.b16 %v2818
        %v2842 = vunpack.c.l.b16 %v2819
        %v2843 = vunpack.c.l.b16 %v2820
        %v2844 = vunpack.c.l.b16 %v2821
        %v2845 = vunpack.c.l.b16 %v2822
        %v2846 = vunpack.c.l.b16 %v2823
        %v2847 = vunpack.c.l.b16 %v2824
        %v2848 = vunpack.c.l.b16 %v2825
        %v2849 = vpack.c.b16 %v2839, %v2838
        %v2850 = vpack.c.b16 %v2841, %v2840
        %v2851 = vpack.c.b16 %v2843, %v2842
        %v2852 = vpack.c.b16 %v2845, %v2844
        %v2853 = vpack.c.b16 %v2847, %v2846
        %v2854 = vpack.c.b16 %v2848, %v2848
        %vm2860 = vcmask 687104
        %v2862 = vsel %vm2860, %v2814, 0
        %vm2864 = vcmask 1041408
        %v2866 = vsel %vm2864, %v2854, 0
        %2868 = vmatprep.subr.bf16.mxu0 0
        %2869 = vmatpush1.bf16.msra.mxu0 %v2849
        %2870 = vmatprep.subr.bf16.mxu0 0
        %2871 = vmatpush1.bf16.msra.mxu0 %v2850
        %2872 = vmatprep.subr.bf16.mxu0 0
        %2873 = vmatpush1.bf16.msra.mxu0 %v2851
        %2874 = vmatprep.subr.bf16.mxu0 0
        %2875 = vmatpush1.bf16.msra.mxu0 %v2852
        %2876 = vmatprep.subr.bf16.mxu0 0
        %2877 = vmatpush1.bf16.msra.mxu0 %v2853
        %2878 = vmatprep.subr.bf16.mxu0 0
        %2879 = vmatpush1.bf16.msra.mxu0 %v2866
        %2880 = vmatprep.subr.bf16.mxu0 0
        %2881 = vmatpush1.bf16.msra.mxu0 0
        %2882 = vmatprep.subr.bf16.mxu0 0
        %2883 = vmatpush1.bf16.msra.mxu0 0
        %2884 = vmatprep.subr.bf16.mxu0 0
        %2885 = vmatpush1.bf16.msra.mxu0 0
        %2886 = vmatprep.subr.bf16.mxu0 0
        %2887 = vmatpush1.bf16.msra.mxu0 0
        %2888 = vmatprep.subr.bf16.mxu0 0
        %2889 = vmatpush1.bf16.msra.mxu0 0
        %2890 = vmatprep.subr.bf16.mxu0 0
        %2891 = vmatpush1.bf16.msra.mxu0 0
        %2892 = vmatprep.subr.bf16.mxu0 0
        %2893 = vmatpush1.bf16.msra.mxu0 0
        %2894 = vmatprep.subr.bf16.mxu0 0
        %2895 = vmatpush1.bf16.msra.mxu0 0
        %2896 = vmatprep.subr.bf16.mxu0 0
        %2897 = vmatpush1.bf16.msra.mxu0 0
        %2898 = vmatprep.subr.bf16.mxu0 0
        %2899 = vmatpush1.bf16.msra.mxu0 0
        %2900 = vmatprep.mubr.bf16.mxu0 0
        %2901 = vmatmul.mubr.bf16.gmra.mrb[0].mxu0 %v2862
        %v2902 = vpop.f32.mrb[0].mxu0
        %v2903 = vadd.f32 %v2826, %v2902
        %v2904 = vpop.f32.mrb[0].mxu0
        %v2905 = vpop.f32.mrb[0].mxu0
        %v2906 = vpop.f32.mrb[0].mxu0
        %2907 = vdwg.mxu0
        %2908 = vst [vmem:[%s474] sm:$0x1] %v2903
        %s2909 = sand.u32 %s315, 1
        %s2910 = scalar_lea.sflag [#allocation4], %s2909
        %s2911 = sand.u32 %s315, 1
        %s2912 = scalar_lea.vmem [#allocation8], %s2911
        // Predicated region
        $region85: #{lenet_forward.1} parent=71 // pred_check
          %p2913 = pneg %p325
        $region86: #{lenet_forward.1} parent=71 // pred_check_branch
          %2915 = sbr.rel (%p2913) target = $region88
        $region87: #{lenet_forward.1} parent=71 // pred_region
          %s2917 = ssub.s32 16, 16
          %2918 = vsyncadd %s2910, %s2917
          %s2919 = smul.addr %s29, 16
          %s2920 = scalar_lea.hbm %s13, %s2919
          %s2922 = sshll.u32 %s2912, 4
          %s2923 = int_to_ptr.vmem [resolvable:$true] %s2922
          %2925 = dma.vmem_to_hbm [thread:$0]  %s2923, 16, %s2920, %s2910
        $region88: #{lenet_forward.1} parent=71 // pred_fallthru
          _
      $region72: #{lenet_forward.1} parent=5 // pred_fallthru
        _
      %p2926 = scmp.le.s32.totalorder 2, %s24
      // Predicated region
      $region89: #{lenet_forward.1} parent=5 // pred_check
        %p2927 = pneg %p2926
      $region90: #{lenet_forward.1} parent=5 // pred_check_branch
        %2929 = sbr.rel (%p2927) target = $region92
      $region91: #{lenet_forward.1} parent=5 // pred_region
        %s2930 = ssub.s32 %s24, 2
        // Predicated region
        $region93: #{lenet_forward.1} parent=91 // pred_check
          %p2931 = pneg %p331
        $region94: #{lenet_forward.1} parent=91 // pred_check_branch
          %2933 = sbr.rel (%p2931) target = $region96
        $region95: #{lenet_forward.1} parent=91 // pred_region
          %s2934 = sand.u32 %s316, 1
          %s2935 = scalar_lea.sflag [#allocation4], %s2934
          %s2936 = sand.u32 %s316, 1
          %s2937 = scalar_lea.vmem [#allocation8], %s2936
          %2938 = dma.done %s2935, 16
        $region96: #{lenet_forward.1} parent=91 // pred_fallthru
          _
      $region92: #{lenet_forward.1} parent=5 // pred_fallthru
        _
    $region6: #{lenet_forward.1} parent=1 // loop_footer
      %s28 = sadd.s32 1, %s24
    $region7: #{lenet_forward.1} parent=1 // loop_footer_branch
      %23 = sbr.rel target = $region3
    $region8: #{lenet_forward.1} parent=1 // loop_exit
      _
    %2939 = vsyncpa [#allocation3], 1
    %s2940 = scalar_lea.sflag [#allocation3], 1
    %2941 = vsyncpa %s2940, 1
    %2942 = vsyncpa [#allocation6], 1
    %2943 = vsyncpa [#allocation4], 1
    %s2944 = scalar_lea.sflag [#allocation4], 1
    %2945 = vsyncpa %s2944, 1

</llo_original>
